<compile_context>
chip_gen: v6e
topology: v6e:2x2x1
jax: 0.10.0
libtpu: 0.0.40
codegen_flags: <defaults>
</compile_context>

<pallas_src>
import jax
import jax.numpy as jnp
from jax import lax
from jax.experimental import pallas as pl
from jax.experimental.pallas import tpu as pltpu

EPS = 1e-4  # safe_softplus jitter


# ----------------------------------------------------------------------------
# Pallas kernel
# ----------------------------------------------------------------------------
def _lstm_recognition_kernel(
    io_ref,      # (T*B, D)   time-major io sequence (forward order; read reversed)
    wih0_ref,    # (D, 4H)    layer-0 input weights, gate columns i|f|o|g
    b0_ref,      # (1, 4H)    b_ih0 + b_hh0
    wrec_ref,    # (2H, 8H)   fused recurrent RHS [[wih1, whh0], [whh1, 0]]
    brec_ref,    # (1, 8H)    [b_ih1 + b_hh1 | 0]
    whead_ref,   # (H, 2S)    [mean | var] head weights, fused
    bhead_ref,   # (1, 2S)
    out_ref,     # (B, 2S)    [loc | softplus(var)+EPS]
):
    B, two_s = out_ref.shape
    S = two_s // 2
    TB = io_ref.shape[0]
    T = TB // B
    G = wih0_ref.shape[1]          # 4H
    H = G // 4

    # ---- hoisted loop-invariant loads / broadcasts --------------------------
    wrec = wrec_ref[...]                                        # (2H, 8H)
    brec = jnp.broadcast_to(brec_ref[...], (B, 2 * G))          # (B, 8H), hoisted

    # ---- layer-0 input projection hoisted out of the recurrence -------------
    # One (T*B, D) @ (D, 4H) MXU push, entirely off the serial chain.
    gates_x0 = (
        jnp.dot(io_ref[...], wih0_ref[...], preferred_element_type=jnp.float32)
        + b0_ref[...]
    )  # (T*B, 4H)

    # ---- gate activation: one EUP pass per cell ------------------------------
    # Gate columns are pre-ordered i|f|o|g: sigmoid lanes [0, 3H), tanh lane
    # block [3H, 4H).  tanh(x) = 2*sigmoid(2x) - 1, so a single full-width
    # sigmoid (EUP) plus two VPU ops covers both.
    lane = lax.broadcasted_iota(jnp.int32, (B, G), 1)
    sig_mask = lane < 3 * H

    def cell(gates, c_prev):
        pre = jnp.where(sig_mask, gates, 2.0 * gates)           # VPU
        s = jax.nn.sigmoid(pre)                                 # EUP (one pass)
        a = jnp.where(sig_mask, s, 2.0 * s - 1.0)               # VPU
        i = a[:, 0 * H:1 * H]
        f = a[:, 1 * H:2 * H]
        o = a[:, 2 * H:3 * H]
        g = a[:, 3 * H:4 * H]
        c = f * c_prev + i * g
        h = o * jnp.tanh(c)
        return h, c

    # ---- recurrence: state carried in vregs, fully unrolled (T static) ------
    zeros_h = jnp.zeros((B, H), jnp.float32)
    h0, c0, h1, c1 = zeros_h, zeros_h, zeros_h, zeros_h
    rec0 = jnp.zeros((B, G), jnp.float32)   # h0_prev @ whh0 (zero for step 0)

    for t in range(T):  # static full unroll; T is small and known at trace time
        # Reversed-time read replaces the module's sequence flip (free: the
        # row offset is static and the slice is off the dependence chain).
        row = (T - 1 - t) * B
        g0 = gates_x0[row:row + B, :] + rec0
        h0, c0 = cell(g0, c0)

        # ONE fused MXU push per step:
        #   [h0 | h1] @ [[wih1, whh0], [whh1, 0]]
        #     lanes [0, 4H)  -> layer-1 gates (pre-bias) for this step
        #     lanes [4H, 8H) -> h0 @ whh0, the recurrent term for step t+1
        # The split at lane 4H = 128 is a vreg boundary -> free slices.
        fused = (
            jnp.dot(jnp.concatenate([h0, h1], axis=1), wrec,
                    preferred_element_type=jnp.float32)
            + brec
        )  # (B, 8H)
        g1 = fused[:, :G]
        rec0 = fused[:, G:]
        h1, c1 = cell(g1, c1)

    # ---- fused mean/var heads: one MXU push, one lane-packed store ----------
    head = (
        jnp.dot(h1, whead_ref[...], preferred_element_type=jnp.float32)
        + bhead_ref[...]
    )  # (B, 2S): columns [0, S) = loc, [S, 2S) = raw var
    head_lane = lax.broadcasted_iota(jnp.int32, head.shape, 1)
    out_ref[...] = jnp.where(head_lane < S, head, jax.nn.softplus(head) + EPS)


# ----------------------------------------------------------------------------
# One-time layout plumbing (gate reorder, bias fusion, fused RHS / head)
# ----------------------------------------------------------------------------
def _reorder_gates(w):
    """Reorder the last (4H) axis from PyTorch's i|f|g|o to i|f|o|g."""
    i, f, g, o = jnp.split(w, 4, axis=-1)
    return jnp.concatenate([i, f, o, g], axis=-1)


def prepare_params(params):
    """Done ONCE per model (not in the per-call jitted path)."""
    wih0 = _reorder_gates(params["wih0_t"])          # (D, 4H)
    whh0 = _reorder_gates(params["whh0_t"])          # (H, 4H)
    b0 = _reorder_gates(params["b0"])                # (1, 4H)
    wih1 = _reorder_gates(params["wih1_t"])          # (H, 4H)
    whh1 = _reorder_gates(params["whh1_t"])          # (H, 4H)
    b1 = _reorder_gates(params["b1"])                # (1, 4H)

    # Fused recurrent RHS: [h0 | h1] @ [[wih1, whh0], [whh1, 0]]
    wrec = jnp.concatenate(
        [jnp.concatenate([wih1, whh0], axis=1),
         jnp.concatenate([whh1, jnp.zeros_like(whh0)], axis=1)],
        axis=0)                                                   # (2H, 8H)
    brec = jnp.concatenate([b1, jnp.zeros_like(b1)], axis=1)      # (1, 8H)

    whead = jnp.concatenate([params["wm_t"], params["wv_t"]], axis=1)  # (H, 2S)
    bhead = jnp.concatenate([params["bm"], params["bv"]], axis=1)      # (1, 2S)

    return {"wih0": wih0, "b0": b0, "wrec": wrec, "brec": brec,
            "whead": whead, "bhead": bhead}


# ----------------------------------------------------------------------------
# Per-call wrapper (minimal: concat + transpose + pallas_call + split)
# ----------------------------------------------------------------------------
@jax.jit
def lstm_recognition_forward(output_sequence, input_sequence, kparams):
    """output_sequence: (B, T, dim_outputs), input_sequence: (B, T, dim_inputs).

    Returns (loc, cov) -- the parameters of the diagonal MultivariateNormal.
    """
    # No jnp.flip here: the kernel reads the time axis in reverse.
    io = jnp.concatenate([output_sequence, input_sequence], axis=-1)   # (B, T, D)
    B, T, D = io.shape
    io_2d = jnp.transpose(io, (1, 0, 2)).reshape(T * B, D).astype(jnp.float32)

    S = kparams["whead"].shape[1] // 2

    vmem = pl.BlockSpec(memory_space=pltpu.MemorySpace.VMEM)

    # Single fully-resident block: total footprint is tiny (<200 KiB), so no
    # grid, no dimension_semantics, no extra pipelining on any generation
    # (v5e/v6e/v7x) -- the kernel is latency-bound on the 8-step serial chain.
    out = pl.pallas_call(
        _lstm_recognition_kernel,
        out_shape=jax.ShapeDtypeStruct((B, 2 * S), jnp.float32),
        in_specs=[vmem] * 7,
        out_specs=vmem,
    )(io_2d, kparams["wih0"], kparams["b0"], kparams["wrec"], kparams["brec"],
      kparams["whead"], kparams["bhead"])

    loc = out[:, :S]
    cov = out[:, S:]
    return loc, cov


# ----------------------------------------------------------------------------
# Deterministic parameter construction (mirrors nn.LSTM / nn.Linear shapes)
# ----------------------------------------------------------------------------
def make_params(key, dim_inputs, dim_outputs, dim_states, hidden_size, variance=1.0):
    D = dim_inputs + dim_outputs
    H = hidden_size
    scale = 1.0 / jnp.sqrt(H)
    ks = jax.random.split(key, 12)

    def u(k, shape):
        return jax.random.uniform(k, shape, jnp.float32, -scale, scale)

    # PyTorch layout: weight_ih_l0 (4H, D), weight_hh_l0 (4H, H), gate order i|f|g|o
    w_ih0 = u(ks[0], (4 * H, D))
    w_hh0 = u(ks[1], (4 * H, H))
    b_ih0 = u(ks[2], (4 * H,))
    b_hh0 = u(ks[3], (4 * H,))
    w_ih1 = u(ks[4], (4 * H, H))
    w_hh1 = u(ks[5], (4 * H, H))
    b_ih1 = u(ks[6], (4 * H,))
    b_hh1 = u(ks[7], (4 * H,))

    lin_scale = 1.0 / jnp.sqrt(H)
    w_m = jax.random.uniform(ks[8], (dim_states, H), jnp.float32, -lin_scale, lin_scale)
    b_m = jax.random.uniform(ks[9], (dim_states,), jnp.float32, -lin_scale, lin_scale)
    w_v = jax.random.uniform(ks[10], (dim_states, H), jnp.float32, -lin_scale, lin_scale)
    b_v = jnp.ones((dim_states,), jnp.float32) * variance  # self.var.bias override

    return {
        "wih0_t": w_ih0.T, "whh0_t": w_hh0.T, "b0": (b_ih0 + b_hh0)[None, :],
        "wih1_t": w_ih1.T, "whh1_t": w_hh1.T, "b1": (b_ih1 + b_hh1)[None, :],
        "wm_t": w_m.T, "bm": b_m[None, :],
        "wv_t": w_v.T, "bv": b_v[None, :],
    }


# ----------------------------------------------------------------------------
# Pure-JAX reference (for correctness check) — standard PyTorch i|f|g|o order
# ----------------------------------------------------------------------------
def reference_forward(output_sequence, input_sequence, params):
    out_f = jnp.flip(output_sequence, axis=1)
    in_f = jnp.flip(input_sequence, axis=1)
    io = jnp.concatenate([out_f, in_f], axis=-1)  # (B, T, D)
    B, T, _ = io.shape
    H = params["whh0_t"].shape[0]

    def cell(x, h, c, wih, whh, b):
        g = x @ wih + h @ whh + b
        i = jax.nn.sigmoid(g[:, :H])
        f = jax.nn.sigmoid(g[:, H:2 * H])
        gg = jnp.tanh(g[:, 2 * H:3 * H])
        o = jax.nn.sigmoid(g[:, 3 * H:])
        c = f * c + i * gg
        return o * jnp.tanh(c), c

    h0 = c0 = h1 = c1 = jnp.zeros((B, H), jnp.float32)
    for t in range(T):
        x_t = io[:, t, :]
        h0, c0 = cell(x_t, h0, c0, params["wih0_t"], params["whh0_t"], params["b0"])
        h1, c1 = cell(h0, h1, c1, params["wih1_t"], params["whh1_t"], params["b1"])

    loc = h1 @ params["wm_t"] + params["bm"]
    cov = jax.nn.softplus(h1 @ params["wv_t"] + params["bv"]) + EPS
    return loc, cov


if __name__ == "__main__":
    # Small shapes consistent with the module's forward.
    batch, length = 2, 8
    dim_outputs, dim_inputs, dim_states, hidden = 4, 3, 3, 32

    key = jax.random.PRNGKey(0)
    k_out, k_in, k_par = jax.random.split(key, 3)
    output_sequence = jax.random.normal(k_out, (batch, length, dim_outputs), jnp.float32)
    input_sequence = jax.random.normal(k_in, (batch, length, dim_inputs), jnp.float32)
    params = make_params(k_par, dim_inputs, dim_outputs, dim_states, hidden)

    # One-time layout plumbing, outside the per-call jitted path.
    kparams = jax.tree_util.tree_map(jnp.asarray, prepare_params(params))

    loc, cov = lstm_recognition_forward(output_sequence, input_sequence, kparams)
    jax.block_until_ready((loc, cov))

    # sanity check against pure-JAX reference
    loc_ref, cov_ref = reference_forward(output_sequence, input_sequence, params)
    assert jnp.allclose(loc, loc_ref, atol=1e-4, rtol=1e-4), "loc mismatch"
    assert jnp.allclose(cov, cov_ref, atol=1e-4, rtol=1e-4), "cov mismatch"
    assert bool(jnp.all(cov > 0.0)), "covariance must be positive"

    # TODO(synk): the torch MultivariateNormal distribution object has no Pallas
    # equivalent; we return its parameters (loc, diagonal covariance) instead.
    print("KERNEL_OK")
</pallas_src>

<mosaic_0001>
module attributes {stable_mosaic.version = 11 : i64} {
  func.func @_lstm_recognition_kernel(%arg0: memref<16x7xf32, #tpu.memory_space<vmem>>, %arg1: memref<7x128xf32, #tpu.memory_space<vmem>>, %arg2: memref<1x128xf32, #tpu.memory_space<vmem>>, %arg3: memref<64x256xf32, #tpu.memory_space<vmem>>, %arg4: memref<1x256xf32, #tpu.memory_space<vmem>>, %arg5: memref<32x6xf32, #tpu.memory_space<vmem>>, %arg6: memref<1x6xf32, #tpu.memory_space<vmem>>, %arg7: memref<2x6xf32, #tpu.memory_space<vmem>>) attributes {dimension_semantics = [], scalar_prefetch = 0 : i64, scratch_operands = 0 : i64, tpu.core_type = #tpu.core_type<tc>} {
    %c0 = arith.constant 0 : index
    %c0_0 = arith.constant 0 : index
    %0 = vector.load %arg3[%c0, %c0_0] : memref<64x256xf32, #tpu.memory_space<vmem>>, vector<64x256xf32>
    %c0_1 = arith.constant 0 : index
    %c0_2 = arith.constant 0 : index
    %1 = vector.load %arg4[%c0_1, %c0_2] : memref<1x256xf32, #tpu.memory_space<vmem>>, vector<1x256xf32>
    %2 = vector.shape_cast %1 : vector<1x256xf32> to vector<1x256xf32>
    %3 = vector.broadcast %2 : vector<1x256xf32> to vector<2x256xf32>
    %c0_3 = arith.constant 0 : index
    %c0_4 = arith.constant 0 : index
    %4 = vector.load %arg0[%c0_3, %c0_4] : memref<16x7xf32, #tpu.memory_space<vmem>>, vector<16x7xf32>
    %c0_5 = arith.constant 0 : index
    %c0_6 = arith.constant 0 : index
    %5 = vector.load %arg1[%c0_5, %c0_6] : memref<7x128xf32, #tpu.memory_space<vmem>>, vector<7x128xf32>
    %cst = arith.constant dense<0.000000e+00> : vector<16x128xf32>
    %6 = tpu.matmul %4, %5, %cst {dimension_numbers = #tpu.dot_dimension_numbers<[1], [0], [0], [1], [0, 0, 1, 1], [], []>} : vector<16x7xf32>, vector<7x128xf32>, vector<16x128xf32> -> vector<16x128xf32>
    %c0_7 = arith.constant 0 : index
    %c0_8 = arith.constant 0 : index
    %7 = vector.load %arg2[%c0_7, %c0_8] : memref<1x128xf32, #tpu.memory_space<vmem>>, vector<1x128xf32>
    %8 = vector.broadcast %7 : vector<1x128xf32> to vector<16x128xf32>
    %9 = arith.addf %6, %8 : vector<16x128xf32>
    %10 = tpu.iota {dimensions = array<i32: 1>} : vector<2x128xi32>
    %c96_i32 = arith.constant 96 : i32
    %11 = vector.broadcast %c96_i32 : i32 to vector<2x128xi32>
    %12 = arith.cmpi slt, %10, %11 : vector<2x128xi32>
    %cst_9 = arith.constant 0.000000e+00 : f32
    %13 = vector.broadcast %cst_9 : f32 to vector<2x32xf32>
    %cst_10 = arith.constant 0.000000e+00 : f32
    %14 = vector.broadcast %cst_10 : f32 to vector<2x128xf32>
    %15 = vector.extract_strided_slice %9 {offsets = [14, 0], sizes = [2, 128], strides = [1, 1]} : vector<16x128xf32> to vector<2x128xf32>
    %16 = arith.addf %15, %14 : vector<2x128xf32>
    %cst_11 = arith.constant 2.000000e+00 : f32
    %17 = vector.broadcast %cst_11 : f32 to vector<2x128xf32>
    %18 = arith.mulf %17, %16 : vector<2x128xf32>
    %19 = arith.select %12, %16, %18 : vector<2x128xi1>, vector<2x128xf32>
    %20 = arith.negf %19 : vector<2x128xf32>
    %21 = math.exp %20 : vector<2x128xf32>
    %cst_12 = arith.constant 1.000000e+00 : f32
    %22 = vector.broadcast %cst_12 : f32 to vector<2x128xf32>
    %23 = arith.addf %22, %21 : vector<2x128xf32>
    %24 = arith.divf %22, %23 : vector<2x128xf32>
    %cst_13 = arith.constant 2.000000e+00 : f32
    %25 = vector.broadcast %cst_13 : f32 to vector<2x128xf32>
    %26 = arith.mulf %25, %24 : vector<2x128xf32>
    %cst_14 = arith.constant 1.000000e+00 : f32
    %27 = vector.broadcast %cst_14 : f32 to vector<2x128xf32>
    %28 = arith.subf %26, %27 : vector<2x128xf32>
    %29 = arith.select %12, %24, %28 : vector<2x128xi1>, vector<2x128xf32>
    %30 = vector.extract_strided_slice %29 {offsets = [0, 0], sizes = [2, 32], strides = [1, 1]} : vector<2x128xf32> to vector<2x32xf32>
    %31 = vector.extract_strided_slice %29 {offsets = [0, 32], sizes = [2, 32], strides = [1, 1]} : vector<2x128xf32> to vector<2x32xf32>
    %32 = vector.extract_strided_slice %29 {offsets = [0, 64], sizes = [2, 32], strides = [1, 1]} : vector<2x128xf32> to vector<2x32xf32>
    %33 = vector.extract_strided_slice %29 {offsets = [0, 96], sizes = [2, 32], strides = [1, 1]} : vector<2x128xf32> to vector<2x32xf32>
    %34 = arith.mulf %31, %13 : vector<2x32xf32>
    %35 = arith.mulf %30, %33 : vector<2x32xf32>
    %36 = arith.addf %34, %35 : vector<2x32xf32>
    %37 = math.tanh %36 : vector<2x32xf32>
    %38 = arith.mulf %32, %37 : vector<2x32xf32>
    %39 = tpu.concatenate %38, %13 in 1 : vector<2x32xf32>, vector<2x32xf32> -> vector<2x64xf32>
    %cst_15 = arith.constant dense<0.000000e+00> : vector<2x256xf32>
    %40 = tpu.matmul %39, %0, %cst_15 {dimension_numbers = #tpu.dot_dimension_numbers<[1], [0], [0], [1], [0, 0, 1, 1], [], []>} : vector<2x64xf32>, vector<64x256xf32>, vector<2x256xf32> -> vector<2x256xf32>
    %41 = arith.addf %40, %3 : vector<2x256xf32>
    %42 = vector.extract_strided_slice %41 {offsets = [0, 0], sizes = [2, 128], strides = [1, 1]} : vector<2x256xf32> to vector<2x128xf32>
    %43 = vector.extract_strided_slice %41 {offsets = [0, 128], sizes = [2, 128], strides = [1, 1]} : vector<2x256xf32> to vector<2x128xf32>
    %cst_16 = arith.constant 2.000000e+00 : f32
    %44 = vector.broadcast %cst_16 : f32 to vector<2x128xf32>
    %45 = arith.mulf %44, %42 : vector<2x128xf32>
    %46 = arith.select %12, %42, %45 : vector<2x128xi1>, vector<2x128xf32>
    %47 = arith.negf %46 : vector<2x128xf32>
    %48 = math.exp %47 : vector<2x128xf32>
    %cst_17 = arith.constant 1.000000e+00 : f32
    %49 = vector.broadcast %cst_17 : f32 to vector<2x128xf32>
    %50 = arith.addf %49, %48 : vector<2x128xf32>
    %51 = arith.divf %49, %50 : vector<2x128xf32>
    %cst_18 = arith.constant 2.000000e+00 : f32
    %52 = vector.broadcast %cst_18 : f32 to vector<2x128xf32>
    %53 = arith.mulf %52, %51 : vector<2x128xf32>
    %cst_19 = arith.constant 1.000000e+00 : f32
    %54 = vector.broadcast %cst_19 : f32 to vector<2x128xf32>
    %55 = arith.subf %53, %54 : vector<2x128xf32>
    %56 = arith.select %12, %51, %55 : vector<2x128xi1>, vector<2x128xf32>
    %57 = vector.extract_strided_slice %56 {offsets = [0, 0], sizes = [2, 32], strides = [1, 1]} : vector<2x128xf32> to vector<2x32xf32>
    %58 = vector.extract_strided_slice %56 {offsets = [0, 32], sizes = [2, 32], strides = [1, 1]} : vector<2x128xf32> to vector<2x32xf32>
    %59 = vector.extract_strided_slice %56 {offsets = [0, 64], sizes = [2, 32], strides = [1, 1]} : vector<2x128xf32> to vector<2x32xf32>
    %60 = vector.extract_strided_slice %56 {offsets = [0, 96], sizes = [2, 32], strides = [1, 1]} : vector<2x128xf32> to vector<2x32xf32>
    %61 = arith.mulf %58, %13 : vector<2x32xf32>
    %62 = arith.mulf %57, %60 : vector<2x32xf32>
    %63 = arith.addf %61, %62 : vector<2x32xf32>
    %64 = math.tanh %63 : vector<2x32xf32>
    %65 = arith.mulf %59, %64 : vector<2x32xf32>
    %66 = vector.extract_strided_slice %9 {offsets = [12, 0], sizes = [2, 128], strides = [1, 1]} : vector<16x128xf32> to vector<2x128xf32>
    %67 = arith.addf %66, %43 : vector<2x128xf32>
    %cst_20 = arith.constant 2.000000e+00 : f32
    %68 = vector.broadcast %cst_20 : f32 to vector<2x128xf32>
    %69 = arith.mulf %68, %67 : vector<2x128xf32>
    %70 = arith.select %12, %67, %69 : vector<2x128xi1>, vector<2x128xf32>
    %71 = arith.negf %70 : vector<2x128xf32>
    %72 = math.exp %71 : vector<2x128xf32>
    %cst_21 = arith.constant 1.000000e+00 : f32
    %73 = vector.broadcast %cst_21 : f32 to vector<2x128xf32>
    %74 = arith.addf %73, %72 : vector<2x128xf32>
    %75 = arith.divf %73, %74 : vector<2x128xf32>
    %cst_22 = arith.constant 2.000000e+00 : f32
    %76 = vector.broadcast %cst_22 : f32 to vector<2x128xf32>
    %77 = arith.mulf %76, %75 : vector<2x128xf32>
    %cst_23 = arith.constant 1.000000e+00 : f32
    %78 = vector.broadcast %cst_23 : f32 to vector<2x128xf32>
    %79 = arith.subf %77, %78 : vector<2x128xf32>
    %80 = arith.select %12, %75, %79 : vector<2x128xi1>, vector<2x128xf32>
    %81 = vector.extract_strided_slice %80 {offsets = [0, 0], sizes = [2, 32], strides = [1, 1]} : vector<2x128xf32> to vector<2x32xf32>
    %82 = vector.extract_strided_slice %80 {offsets = [0, 32], sizes = [2, 32], strides = [1, 1]} : vector<2x128xf32> to vector<2x32xf32>
    %83 = vector.extract_strided_slice %80 {offsets = [0, 64], sizes = [2, 32], strides = [1, 1]} : vector<2x128xf32> to vector<2x32xf32>
    %84 = vector.extract_strided_slice %80 {offsets = [0, 96], sizes = [2, 32], strides = [1, 1]} : vector<2x128xf32> to vector<2x32xf32>
    %85 = arith.mulf %82, %36 : vector<2x32xf32>
    %86 = arith.mulf %81, %84 : vector<2x32xf32>
    %87 = arith.addf %85, %86 : vector<2x32xf32>
    %88 = math.tanh %87 : vector<2x32xf32>
    %89 = arith.mulf %83, %88 : vector<2x32xf32>
    %90 = tpu.concatenate %89, %65 in 1 : vector<2x32xf32>, vector<2x32xf32> -> vector<2x64xf32>
    %cst_24 = arith.constant dense<0.000000e+00> : vector<2x256xf32>
    %91 = tpu.matmul %90, %0, %cst_24 {dimension_numbers = #tpu.dot_dimension_numbers<[1], [0], [0], [1], [0, 0, 1, 1], [], []>} : vector<2x64xf32>, vector<64x256xf32>, vector<2x256xf32> -> vector<2x256xf32>
    %92 = arith.addf %91, %3 : vector<2x256xf32>
    %93 = vector.extract_strided_slice %92 {offsets = [0, 0], sizes = [2, 128], strides = [1, 1]} : vector<2x256xf32> to vector<2x128xf32>
    %94 = vector.extract_strided_slice %92 {offsets = [0, 128], sizes = [2, 128], strides = [1, 1]} : vector<2x256xf32> to vector<2x128xf32>
    %cst_25 = arith.constant 2.000000e+00 : f32
    %95 = vector.broadcast %cst_25 : f32 to vector<2x128xf32>
    %96 = arith.mulf %95, %93 : vector<2x128xf32>
    %97 = arith.select %12, %93, %96 : vector<2x128xi1>, vector<2x128xf32>
    %98 = arith.negf %97 : vector<2x128xf32>
    %99 = math.exp %98 : vector<2x128xf32>
    %cst_26 = arith.constant 1.000000e+00 : f32
    %100 = vector.broadcast %cst_26 : f32 to vector<2x128xf32>
    %101 = arith.addf %100, %99 : vector<2x128xf32>
    %102 = arith.divf %100, %101 : vector<2x128xf32>
    %cst_27 = arith.constant 2.000000e+00 : f32
    %103 = vector.broadcast %cst_27 : f32 to vector<2x128xf32>
    %104 = arith.mulf %103, %102 : vector<2x128xf32>
    %cst_28 = arith.constant 1.000000e+00 : f32
    %105 = vector.broadcast %cst_28 : f32 to vector<2x128xf32>
    %106 = arith.subf %104, %105 : vector<2x128xf32>
    %107 = arith.select %12, %102, %106 : vector<2x128xi1>, vector<2x128xf32>
    %108 = vector.extract_strided_slice %107 {offsets = [0, 0], sizes = [2, 32], strides = [1, 1]} : vector<2x128xf32> to vector<2x32xf32>
    %109 = vector.extract_strided_slice %107 {offsets = [0, 32], sizes = [2, 32], strides = [1, 1]} : vector<2x128xf32> to vector<2x32xf32>
    %110 = vector.extract_strided_slice %107 {offsets = [0, 64], sizes = [2, 32], strides = [1, 1]} : vector<2x128xf32> to vector<2x32xf32>
    %111 = vector.extract_strided_slice %107 {offsets = [0, 96], sizes = [2, 32], strides = [1, 1]} : vector<2x128xf32> to vector<2x32xf32>
    %112 = arith.mulf %109, %63 : vector<2x32xf32>
    %113 = arith.mulf %108, %111 : vector<2x32xf32>
    %114 = arith.addf %112, %113 : vector<2x32xf32>
    %115 = math.tanh %114 : vector<2x32xf32>
    %116 = arith.mulf %110, %115 : vector<2x32xf32>
    %117 = vector.extract_strided_slice %9 {offsets = [10, 0], sizes = [2, 128], strides = [1, 1]} : vector<16x128xf32> to vector<2x128xf32>
    %118 = arith.addf %117, %94 : vector<2x128xf32>
    %cst_29 = arith.constant 2.000000e+00 : f32
    %119 = vector.broadcast %cst_29 : f32 to vector<2x128xf32>
    %120 = arith.mulf %119, %118 : vector<2x128xf32>
    %121 = arith.select %12, %118, %120 : vector<2x128xi1>, vector<2x128xf32>
    %122 = arith.negf %121 : vector<2x128xf32>
    %123 = math.exp %122 : vector<2x128xf32>
    %cst_30 = arith.constant 1.000000e+00 : f32
    %124 = vector.broadcast %cst_30 : f32 to vector<2x128xf32>
    %125 = arith.addf %124, %123 : vector<2x128xf32>
    %126 = arith.divf %124, %125 : vector<2x128xf32>
    %cst_31 = arith.constant 2.000000e+00 : f32
    %127 = vector.broadcast %cst_31 : f32 to vector<2x128xf32>
    %128 = arith.mulf %127, %126 : vector<2x128xf32>
    %cst_32 = arith.constant 1.000000e+00 : f32
    %129 = vector.broadcast %cst_32 : f32 to vector<2x128xf32>
    %130 = arith.subf %128, %129 : vector<2x128xf32>
    %131 = arith.select %12, %126, %130 : vector<2x128xi1>, vector<2x128xf32>
    %132 = vector.extract_strided_slice %131 {offsets = [0, 0], sizes = [2, 32], strides = [1, 1]} : vector<2x128xf32> to vector<2x32xf32>
    %133 = vector.extract_strided_slice %131 {offsets = [0, 32], sizes = [2, 32], strides = [1, 1]} : vector<2x128xf32> to vector<2x32xf32>
    %134 = vector.extract_strided_slice %131 {offsets = [0, 64], sizes = [2, 32], strides = [1, 1]} : vector<2x128xf32> to vector<2x32xf32>
    %135 = vector.extract_strided_slice %131 {offsets = [0, 96], sizes = [2, 32], strides = [1, 1]} : vector<2x128xf32> to vector<2x32xf32>
    %136 = arith.mulf %133, %87 : vector<2x32xf32>
    %137 = arith.mulf %132, %135 : vector<2x32xf32>
    %138 = arith.addf %136, %137 : vector<2x32xf32>
    %139 = math.tanh %138 : vector<2x32xf32>
    %140 = arith.mulf %134, %139 : vector<2x32xf32>
    %141 = tpu.concatenate %140, %116 in 1 : vector<2x32xf32>, vector<2x32xf32> -> vector<2x64xf32>
    %cst_33 = arith.constant dense<0.000000e+00> : vector<2x256xf32>
    %142 = tpu.matmul %141, %0, %cst_33 {dimension_numbers = #tpu.dot_dimension_numbers<[1], [0], [0], [1], [0, 0, 1, 1], [], []>} : vector<2x64xf32>, vector<64x256xf32>, vector<2x256xf32> -> vector<2x256xf32>
    %143 = arith.addf %142, %3 : vector<2x256xf32>
    %144 = vector.extract_strided_slice %143 {offsets = [0, 0], sizes = [2, 128], strides = [1, 1]} : vector<2x256xf32> to vector<2x128xf32>
    %145 = vector.extract_strided_slice %143 {offsets = [0, 128], sizes = [2, 128], strides = [1, 1]} : vector<2x256xf32> to vector<2x128xf32>
    %cst_34 = arith.constant 2.000000e+00 : f32
    %146 = vector.broadcast %cst_34 : f32 to vector<2x128xf32>
    %147 = arith.mulf %146, %144 : vector<2x128xf32>
    %148 = arith.select %12, %144, %147 : vector<2x128xi1>, vector<2x128xf32>
    %149 = arith.negf %148 : vector<2x128xf32>
    %150 = math.exp %149 : vector<2x128xf32>
    %cst_35 = arith.constant 1.000000e+00 : f32
    %151 = vector.broadcast %cst_35 : f32 to vector<2x128xf32>
    %152 = arith.addf %151, %150 : vector<2x128xf32>
    %153 = arith.divf %151, %152 : vector<2x128xf32>
    %cst_36 = arith.constant 2.000000e+00 : f32
    %154 = vector.broadcast %cst_36 : f32 to vector<2x128xf32>
    %155 = arith.mulf %154, %153 : vector<2x128xf32>
    %cst_37 = arith.constant 1.000000e+00 : f32
    %156 = vector.broadcast %cst_37 : f32 to vector<2x128xf32>
    %157 = arith.subf %155, %156 : vector<2x128xf32>
    %158 = arith.select %12, %153, %157 : vector<2x128xi1>, vector<2x128xf32>
    %159 = vector.extract_strided_slice %158 {offsets = [0, 0], sizes = [2, 32], strides = [1, 1]} : vector<2x128xf32> to vector<2x32xf32>
    %160 = vector.extract_strided_slice %158 {offsets = [0, 32], sizes = [2, 32], strides = [1, 1]} : vector<2x128xf32> to vector<2x32xf32>
    %161 = vector.extract_strided_slice %158 {offsets = [0, 64], sizes = [2, 32], strides = [1, 1]} : vector<2x128xf32> to vector<2x32xf32>
    %162 = vector.extract_strided_slice %158 {offsets = [0, 96], sizes = [2, 32], strides = [1, 1]} : vector<2x128xf32> to vector<2x32xf32>
    %163 = arith.mulf %160, %114 : vector<2x32xf32>
    %164 = arith.mulf %159, %162 : vector<2x32xf32>
    %165 = arith.addf %163, %164 : vector<2x32xf32>
    %166 = math.tanh %165 : vector<2x32xf32>
    %167 = arith.mulf %161, %166 : vector<2x32xf32>
    %168 = vector.extract_strided_slice %9 {offsets = [8, 0], sizes = [2, 128], strides = [1, 1]} : vector<16x128xf32> to vector<2x128xf32>
    %169 = arith.addf %168, %145 : vector<2x128xf32>
    %cst_38 = arith.constant 2.000000e+00 : f32
    %170 = vector.broadcast %cst_38 : f32 to vector<2x128xf32>
    %171 = arith.mulf %170, %169 : vector<2x128xf32>
    %172 = arith.select %12, %169, %171 : vector<2x128xi1>, vector<2x128xf32>
    %173 = arith.negf %172 : vector<2x128xf32>
    %174 = math.exp %173 : vector<2x128xf32>
    %cst_39 = arith.constant 1.000000e+00 : f32
    %175 = vector.broadcast %cst_39 : f32 to vector<2x128xf32>
    %176 = arith.addf %175, %174 : vector<2x128xf32>
    %177 = arith.divf %175, %176 : vector<2x128xf32>
    %cst_40 = arith.constant 2.000000e+00 : f32
    %178 = vector.broadcast %cst_40 : f32 to vector<2x128xf32>
    %179 = arith.mulf %178, %177 : vector<2x128xf32>
    %cst_41 = arith.constant 1.000000e+00 : f32
    %180 = vector.broadcast %cst_41 : f32 to vector<2x128xf32>
    %181 = arith.subf %179, %180 : vector<2x128xf32>
    %182 = arith.select %12, %177, %181 : vector<2x128xi1>, vector<2x128xf32>
    %183 = vector.extract_strided_slice %182 {offsets = [0, 0], sizes = [2, 32], strides = [1, 1]} : vector<2x128xf32> to vector<2x32xf32>
    %184 = vector.extract_strided_slice %182 {offsets = [0, 32], sizes = [2, 32], strides = [1, 1]} : vector<2x128xf32> to vector<2x32xf32>
    %185 = vector.extract_strided_slice %182 {offsets = [0, 64], sizes = [2, 32], strides = [1, 1]} : vector<2x128xf32> to vector<2x32xf32>
    %186 = vector.extract_strided_slice %182 {offsets = [0, 96], sizes = [2, 32], strides = [1, 1]} : vector<2x128xf32> to vector<2x32xf32>
    %187 = arith.mulf %184, %138 : vector<2x32xf32>
    %188 = arith.mulf %183, %186 : vector<2x32xf32>
    %189 = arith.addf %187, %188 : vector<2x32xf32>
    %190 = math.tanh %189 : vector<2x32xf32>
    %191 = arith.mulf %185, %190 : vector<2x32xf32>
    %192 = tpu.concatenate %191, %167 in 1 : vector<2x32xf32>, vector<2x32xf32> -> vector<2x64xf32>
    %cst_42 = arith.constant dense<0.000000e+00> : vector<2x256xf32>
    %193 = tpu.matmul %192, %0, %cst_42 {dimension_numbers = #tpu.dot_dimension_numbers<[1], [0], [0], [1], [0, 0, 1, 1], [], []>} : vector<2x64xf32>, vector<64x256xf32>, vector<2x256xf32> -> vector<2x256xf32>
    %194 = arith.addf %193, %3 : vector<2x256xf32>
    %195 = vector.extract_strided_slice %194 {offsets = [0, 0], sizes = [2, 128], strides = [1, 1]} : vector<2x256xf32> to vector<2x128xf32>
    %196 = vector.extract_strided_slice %194 {offsets = [0, 128], sizes = [2, 128], strides = [1, 1]} : vector<2x256xf32> to vector<2x128xf32>
    %cst_43 = arith.constant 2.000000e+00 : f32
    %197 = vector.broadcast %cst_43 : f32 to vector<2x128xf32>
    %198 = arith.mulf %197, %195 : vector<2x128xf32>
    %199 = arith.select %12, %195, %198 : vector<2x128xi1>, vector<2x128xf32>
    %200 = arith.negf %199 : vector<2x128xf32>
    %201 = math.exp %200 : vector<2x128xf32>
    %cst_44 = arith.constant 1.000000e+00 : f32
    %202 = vector.broadcast %cst_44 : f32 to vector<2x128xf32>
    %203 = arith.addf %202, %201 : vector<2x128xf32>
    %204 = arith.divf %202, %203 : vector<2x128xf32>
    %cst_45 = arith.constant 2.000000e+00 : f32
    %205 = vector.broadcast %cst_45 : f32 to vector<2x128xf32>
    %206 = arith.mulf %205, %204 : vector<2x128xf32>
    %cst_46 = arith.constant 1.000000e+00 : f32
    %207 = vector.broadcast %cst_46 : f32 to vector<2x128xf32>
    %208 = arith.subf %206, %207 : vector<2x128xf32>
    %209 = arith.select %12, %204, %208 : vector<2x128xi1>, vector<2x128xf32>
    %210 = vector.extract_strided_slice %209 {offsets = [0, 0], sizes = [2, 32], strides = [1, 1]} : vector<2x128xf32> to vector<2x32xf32>
    %211 = vector.extract_strided_slice %209 {offsets = [0, 32], sizes = [2, 32], strides = [1, 1]} : vector<2x128xf32> to vector<2x32xf32>
    %212 = vector.extract_strided_slice %209 {offsets = [0, 64], sizes = [2, 32], strides = [1, 1]} : vector<2x128xf32> to vector<2x32xf32>
    %213 = vector.extract_strided_slice %209 {offsets = [0, 96], sizes = [2, 32], strides = [1, 1]} : vector<2x128xf32> to vector<2x32xf32>
    %214 = arith.mulf %211, %165 : vector<2x32xf32>
    %215 = arith.mulf %210, %213 : vector<2x32xf32>
    %216 = arith.addf %214, %215 : vector<2x32xf32>
    %217 = math.tanh %216 : vector<2x32xf32>
    %218 = arith.mulf %212, %217 : vector<2x32xf32>
    %219 = vector.extract_strided_slice %9 {offsets = [6, 0], sizes = [2, 128], strides = [1, 1]} : vector<16x128xf32> to vector<2x128xf32>
    %220 = arith.addf %219, %196 : vector<2x128xf32>
    %cst_47 = arith.constant 2.000000e+00 : f32
    %221 = vector.broadcast %cst_47 : f32 to vector<2x128xf32>
    %222 = arith.mulf %221, %220 : vector<2x128xf32>
    %223 = arith.select %12, %220, %222 : vector<2x128xi1>, vector<2x128xf32>
    %224 = arith.negf %223 : vector<2x128xf32>
    %225 = math.exp %224 : vector<2x128xf32>
    %cst_48 = arith.constant 1.000000e+00 : f32
    %226 = vector.broadcast %cst_48 : f32 to vector<2x128xf32>
    %227 = arith.addf %226, %225 : vector<2x128xf32>
    %228 = arith.divf %226, %227 : vector<2x128xf32>
    %cst_49 = arith.constant 2.000000e+00 : f32
    %229 = vector.broadcast %cst_49 : f32 to vector<2x128xf32>
    %230 = arith.mulf %229, %228 : vector<2x128xf32>
    %cst_50 = arith.constant 1.000000e+00 : f32
    %231 = vector.broadcast %cst_50 : f32 to vector<2x128xf32>
    %232 = arith.subf %230, %231 : vector<2x128xf32>
    %233 = arith.select %12, %228, %232 : vector<2x128xi1>, vector<2x128xf32>
    %234 = vector.extract_strided_slice %233 {offsets = [0, 0], sizes = [2, 32], strides = [1, 1]} : vector<2x128xf32> to vector<2x32xf32>
    %235 = vector.extract_strided_slice %233 {offsets = [0, 32], sizes = [2, 32], strides = [1, 1]} : vector<2x128xf32> to vector<2x32xf32>
    %236 = vector.extract_strided_slice %233 {offsets = [0, 64], sizes = [2, 32], strides = [1, 1]} : vector<2x128xf32> to vector<2x32xf32>
    %237 = vector.extract_strided_slice %233 {offsets = [0, 96], sizes = [2, 32], strides = [1, 1]} : vector<2x128xf32> to vector<2x32xf32>
    %238 = arith.mulf %235, %189 : vector<2x32xf32>
    %239 = arith.mulf %234, %237 : vector<2x32xf32>
    %240 = arith.addf %238, %239 : vector<2x32xf32>
    %241 = math.tanh %240 : vector<2x32xf32>
    %242 = arith.mulf %236, %241 : vector<2x32xf32>
    %243 = tpu.concatenate %242, %218 in 1 : vector<2x32xf32>, vector<2x32xf32> -> vector<2x64xf32>
    %cst_51 = arith.constant dense<0.000000e+00> : vector<2x256xf32>
    %244 = tpu.matmul %243, %0, %cst_51 {dimension_numbers = #tpu.dot_dimension_numbers<[1], [0], [0], [1], [0, 0, 1, 1], [], []>} : vector<2x64xf32>, vector<64x256xf32>, vector<2x256xf32> -> vector<2x256xf32>
    %245 = arith.addf %244, %3 : vector<2x256xf32>
    %246 = vector.extract_strided_slice %245 {offsets = [0, 0], sizes = [2, 128], strides = [1, 1]} : vector<2x256xf32> to vector<2x128xf32>
    %247 = vector.extract_strided_slice %245 {offsets = [0, 128], sizes = [2, 128], strides = [1, 1]} : vector<2x256xf32> to vector<2x128xf32>
    %cst_52 = arith.constant 2.000000e+00 : f32
    %248 = vector.broadcast %cst_52 : f32 to vector<2x128xf32>
    %249 = arith.mulf %248, %246 : vector<2x128xf32>
    %250 = arith.select %12, %246, %249 : vector<2x128xi1>, vector<2x128xf32>
    %251 = arith.negf %250 : vector<2x128xf32>
    %252 = math.exp %251 : vector<2x128xf32>
    %cst_53 = arith.constant 1.000000e+00 : f32
    %253 = vector.broadcast %cst_53 : f32 to vector<2x128xf32>
    %254 = arith.addf %253, %252 : vector<2x128xf32>
    %255 = arith.divf %253, %254 : vector<2x128xf32>
    %cst_54 = arith.constant 2.000000e+00 : f32
    %256 = vector.broadcast %cst_54 : f32 to vector<2x128xf32>
    %257 = arith.mulf %256, %255 : vector<2x128xf32>
    %cst_55 = arith.constant 1.000000e+00 : f32
    %258 = vector.broadcast %cst_55 : f32 to vector<2x128xf32>
    %259 = arith.subf %257, %258 : vector<2x128xf32>
    %260 = arith.select %12, %255, %259 : vector<2x128xi1>, vector<2x128xf32>
    %261 = vector.extract_strided_slice %260 {offsets = [0, 0], sizes = [2, 32], strides = [1, 1]} : vector<2x128xf32> to vector<2x32xf32>
    %262 = vector.extract_strided_slice %260 {offsets = [0, 32], sizes = [2, 32], strides = [1, 1]} : vector<2x128xf32> to vector<2x32xf32>
    %263 = vector.extract_strided_slice %260 {offsets = [0, 64], sizes = [2, 32], strides = [1, 1]} : vector<2x128xf32> to vector<2x32xf32>
    %264 = vector.extract_strided_slice %260 {offsets = [0, 96], sizes = [2, 32], strides = [1, 1]} : vector<2x128xf32> to vector<2x32xf32>
    %265 = arith.mulf %262, %216 : vector<2x32xf32>
    %266 = arith.mulf %261, %264 : vector<2x32xf32>
    %267 = arith.addf %265, %266 : vector<2x32xf32>
    %268 = math.tanh %267 : vector<2x32xf32>
    %269 = arith.mulf %263, %268 : vector<2x32xf32>
    %270 = vector.extract_strided_slice %9 {offsets = [4, 0], sizes = [2, 128], strides = [1, 1]} : vector<16x128xf32> to vector<2x128xf32>
    %271 = arith.addf %270, %247 : vector<2x128xf32>
    %cst_56 = arith.constant 2.000000e+00 : f32
    %272 = vector.broadcast %cst_56 : f32 to vector<2x128xf32>
    %273 = arith.mulf %272, %271 : vector<2x128xf32>
    %274 = arith.select %12, %271, %273 : vector<2x128xi1>, vector<2x128xf32>
    %275 = arith.negf %274 : vector<2x128xf32>
    %276 = math.exp %275 : vector<2x128xf32>
    %cst_57 = arith.constant 1.000000e+00 : f32
    %277 = vector.broadcast %cst_57 : f32 to vector<2x128xf32>
    %278 = arith.addf %277, %276 : vector<2x128xf32>
    %279 = arith.divf %277, %278 : vector<2x128xf32>
    %cst_58 = arith.constant 2.000000e+00 : f32
    %280 = vector.broadcast %cst_58 : f32 to vector<2x128xf32>
    %281 = arith.mulf %280, %279 : vector<2x128xf32>
    %cst_59 = arith.constant 1.000000e+00 : f32
    %282 = vector.broadcast %cst_59 : f32 to vector<2x128xf32>
    %283 = arith.subf %281, %282 : vector<2x128xf32>
    %284 = arith.select %12, %279, %283 : vector<2x128xi1>, vector<2x128xf32>
    %285 = vector.extract_strided_slice %284 {offsets = [0, 0], sizes = [2, 32], strides = [1, 1]} : vector<2x128xf32> to vector<2x32xf32>
    %286 = vector.extract_strided_slice %284 {offsets = [0, 32], sizes = [2, 32], strides = [1, 1]} : vector<2x128xf32> to vector<2x32xf32>
    %287 = vector.extract_strided_slice %284 {offsets = [0, 64], sizes = [2, 32], strides = [1, 1]} : vector<2x128xf32> to vector<2x32xf32>
    %288 = vector.extract_strided_slice %284 {offsets = [0, 96], sizes = [2, 32], strides = [1, 1]} : vector<2x128xf32> to vector<2x32xf32>
    %289 = arith.mulf %286, %240 : vector<2x32xf32>
    %290 = arith.mulf %285, %288 : vector<2x32xf32>
    %291 = arith.addf %289, %290 : vector<2x32xf32>
    %292 = math.tanh %291 : vector<2x32xf32>
    %293 = arith.mulf %287, %292 : vector<2x32xf32>
    %294 = tpu.concatenate %293, %269 in 1 : vector<2x32xf32>, vector<2x32xf32> -> vector<2x64xf32>
    %cst_60 = arith.constant dense<0.000000e+00> : vector<2x256xf32>
    %295 = tpu.matmul %294, %0, %cst_60 {dimension_numbers = #tpu.dot_dimension_numbers<[1], [0], [0], [1], [0, 0, 1, 1], [], []>} : vector<2x64xf32>, vector<64x256xf32>, vector<2x256xf32> -> vector<2x256xf32>
    %296 = arith.addf %295, %3 : vector<2x256xf32>
    %297 = vector.extract_strided_slice %296 {offsets = [0, 0], sizes = [2, 128], strides = [1, 1]} : vector<2x256xf32> to vector<2x128xf32>
    %298 = vector.extract_strided_slice %296 {offsets = [0, 128], sizes = [2, 128], strides = [1, 1]} : vector<2x256xf32> to vector<2x128xf32>
    %cst_61 = arith.constant 2.000000e+00 : f32
    %299 = vector.broadcast %cst_61 : f32 to vector<2x128xf32>
    %300 = arith.mulf %299, %297 : vector<2x128xf32>
    %301 = arith.select %12, %297, %300 : vector<2x128xi1>, vector<2x128xf32>
    %302 = arith.negf %301 : vector<2x128xf32>
    %303 = math.exp %302 : vector<2x128xf32>
    %cst_62 = arith.constant 1.000000e+00 : f32
    %304 = vector.broadcast %cst_62 : f32 to vector<2x128xf32>
    %305 = arith.addf %304, %303 : vector<2x128xf32>
    %306 = arith.divf %304, %305 : vector<2x128xf32>
    %cst_63 = arith.constant 2.000000e+00 : f32
    %307 = vector.broadcast %cst_63 : f32 to vector<2x128xf32>
    %308 = arith.mulf %307, %306 : vector<2x128xf32>
    %cst_64 = arith.constant 1.000000e+00 : f32
    %309 = vector.broadcast %cst_64 : f32 to vector<2x128xf32>
    %310 = arith.subf %308, %309 : vector<2x128xf32>
    %311 = arith.select %12, %306, %310 : vector<2x128xi1>, vector<2x128xf32>
    %312 = vector.extract_strided_slice %311 {offsets = [0, 0], sizes = [2, 32], strides = [1, 1]} : vector<2x128xf32> to vector<2x32xf32>
    %313 = vector.extract_strided_slice %311 {offsets = [0, 32], sizes = [2, 32], strides = [1, 1]} : vector<2x128xf32> to vector<2x32xf32>
    %314 = vector.extract_strided_slice %311 {offsets = [0, 64], sizes = [2, 32], strides = [1, 1]} : vector<2x128xf32> to vector<2x32xf32>
    %315 = vector.extract_strided_slice %311 {offsets = [0, 96], sizes = [2, 32], strides = [1, 1]} : vector<2x128xf32> to vector<2x32xf32>
    %316 = arith.mulf %313, %267 : vector<2x32xf32>
    %317 = arith.mulf %312, %315 : vector<2x32xf32>
    %318 = arith.addf %316, %317 : vector<2x32xf32>
    %319 = math.tanh %318 : vector<2x32xf32>
    %320 = arith.mulf %314, %319 : vector<2x32xf32>
    %321 = vector.extract_strided_slice %9 {offsets = [2, 0], sizes = [2, 128], strides = [1, 1]} : vector<16x128xf32> to vector<2x128xf32>
    %322 = arith.addf %321, %298 : vector<2x128xf32>
    %cst_65 = arith.constant 2.000000e+00 : f32
    %323 = vector.broadcast %cst_65 : f32 to vector<2x128xf32>
    %324 = arith.mulf %323, %322 : vector<2x128xf32>
    %325 = arith.select %12, %322, %324 : vector<2x128xi1>, vector<2x128xf32>
    %326 = arith.negf %325 : vector<2x128xf32>
    %327 = math.exp %326 : vector<2x128xf32>
    %cst_66 = arith.constant 1.000000e+00 : f32
    %328 = vector.broadcast %cst_66 : f32 to vector<2x128xf32>
    %329 = arith.addf %328, %327 : vector<2x128xf32>
    %330 = arith.divf %328, %329 : vector<2x128xf32>
    %cst_67 = arith.constant 2.000000e+00 : f32
    %331 = vector.broadcast %cst_67 : f32 to vector<2x128xf32>
    %332 = arith.mulf %331, %330 : vector<2x128xf32>
    %cst_68 = arith.constant 1.000000e+00 : f32
    %333 = vector.broadcast %cst_68 : f32 to vector<2x128xf32>
    %334 = arith.subf %332, %333 : vector<2x128xf32>
    %335 = arith.select %12, %330, %334 : vector<2x128xi1>, vector<2x128xf32>
    %336 = vector.extract_strided_slice %335 {offsets = [0, 0], sizes = [2, 32], strides = [1, 1]} : vector<2x128xf32> to vector<2x32xf32>
    %337 = vector.extract_strided_slice %335 {offsets = [0, 32], sizes = [2, 32], strides = [1, 1]} : vector<2x128xf32> to vector<2x32xf32>
    %338 = vector.extract_strided_slice %335 {offsets = [0, 64], sizes = [2, 32], strides = [1, 1]} : vector<2x128xf32> to vector<2x32xf32>
    %339 = vector.extract_strided_slice %335 {offsets = [0, 96], sizes = [2, 32], strides = [1, 1]} : vector<2x128xf32> to vector<2x32xf32>
    %340 = arith.mulf %337, %291 : vector<2x32xf32>
    %341 = arith.mulf %336, %339 : vector<2x32xf32>
    %342 = arith.addf %340, %341 : vector<2x32xf32>
    %343 = math.tanh %342 : vector<2x32xf32>
    %344 = arith.mulf %338, %343 : vector<2x32xf32>
    %345 = tpu.concatenate %344, %320 in 1 : vector<2x32xf32>, vector<2x32xf32> -> vector<2x64xf32>
    %cst_69 = arith.constant dense<0.000000e+00> : vector<2x256xf32>
    %346 = tpu.matmul %345, %0, %cst_69 {dimension_numbers = #tpu.dot_dimension_numbers<[1], [0], [0], [1], [0, 0, 1, 1], [], []>} : vector<2x64xf32>, vector<64x256xf32>, vector<2x256xf32> -> vector<2x256xf32>
    %347 = arith.addf %346, %3 : vector<2x256xf32>
    %348 = vector.extract_strided_slice %347 {offsets = [0, 0], sizes = [2, 128], strides = [1, 1]} : vector<2x256xf32> to vector<2x128xf32>
    %349 = vector.extract_strided_slice %347 {offsets = [0, 128], sizes = [2, 128], strides = [1, 1]} : vector<2x256xf32> to vector<2x128xf32>
    %cst_70 = arith.constant 2.000000e+00 : f32
    %350 = vector.broadcast %cst_70 : f32 to vector<2x128xf32>
    %351 = arith.mulf %350, %348 : vector<2x128xf32>
    %352 = arith.select %12, %348, %351 : vector<2x128xi1>, vector<2x128xf32>
    %353 = arith.negf %352 : vector<2x128xf32>
    %354 = math.exp %353 : vector<2x128xf32>
    %cst_71 = arith.constant 1.000000e+00 : f32
    %355 = vector.broadcast %cst_71 : f32 to vector<2x128xf32>
    %356 = arith.addf %355, %354 : vector<2x128xf32>
    %357 = arith.divf %355, %356 : vector<2x128xf32>
    %cst_72 = arith.constant 2.000000e+00 : f32
    %358 = vector.broadcast %cst_72 : f32 to vector<2x128xf32>
    %359 = arith.mulf %358, %357 : vector<2x128xf32>
    %cst_73 = arith.constant 1.000000e+00 : f32
    %360 = vector.broadcast %cst_73 : f32 to vector<2x128xf32>
    %361 = arith.subf %359, %360 : vector<2x128xf32>
    %362 = arith.select %12, %357, %361 : vector<2x128xi1>, vector<2x128xf32>
    %363 = vector.extract_strided_slice %362 {offsets = [0, 0], sizes = [2, 32], strides = [1, 1]} : vector<2x128xf32> to vector<2x32xf32>
    %364 = vector.extract_strided_slice %362 {offsets = [0, 32], sizes = [2, 32], strides = [1, 1]} : vector<2x128xf32> to vector<2x32xf32>
    %365 = vector.extract_strided_slice %362 {offsets = [0, 64], sizes = [2, 32], strides = [1, 1]} : vector<2x128xf32> to vector<2x32xf32>
    %366 = vector.extract_strided_slice %362 {offsets = [0, 96], sizes = [2, 32], strides = [1, 1]} : vector<2x128xf32> to vector<2x32xf32>
    %367 = arith.mulf %364, %318 : vector<2x32xf32>
    %368 = arith.mulf %363, %366 : vector<2x32xf32>
    %369 = arith.addf %367, %368 : vector<2x32xf32>
    %370 = math.tanh %369 : vector<2x32xf32>
    %371 = arith.mulf %365, %370 : vector<2x32xf32>
    %372 = vector.extract_strided_slice %9 {offsets = [0, 0], sizes = [2, 128], strides = [1, 1]} : vector<16x128xf32> to vector<2x128xf32>
    %373 = arith.addf %372, %349 : vector<2x128xf32>
    %cst_74 = arith.constant 2.000000e+00 : f32
    %374 = vector.broadcast %cst_74 : f32 to vector<2x128xf32>
    %375 = arith.mulf %374, %373 : vector<2x128xf32>
    %376 = arith.select %12, %373, %375 : vector<2x128xi1>, vector<2x128xf32>
    %377 = arith.negf %376 : vector<2x128xf32>
    %378 = math.exp %377 : vector<2x128xf32>
    %cst_75 = arith.constant 1.000000e+00 : f32
    %379 = vector.broadcast %cst_75 : f32 to vector<2x128xf32>
    %380 = arith.addf %379, %378 : vector<2x128xf32>
    %381 = arith.divf %379, %380 : vector<2x128xf32>
    %cst_76 = arith.constant 2.000000e+00 : f32
    %382 = vector.broadcast %cst_76 : f32 to vector<2x128xf32>
    %383 = arith.mulf %382, %381 : vector<2x128xf32>
    %cst_77 = arith.constant 1.000000e+00 : f32
    %384 = vector.broadcast %cst_77 : f32 to vector<2x128xf32>
    %385 = arith.subf %383, %384 : vector<2x128xf32>
    %386 = arith.select %12, %381, %385 : vector<2x128xi1>, vector<2x128xf32>
    %387 = vector.extract_strided_slice %386 {offsets = [0, 0], sizes = [2, 32], strides = [1, 1]} : vector<2x128xf32> to vector<2x32xf32>
    %388 = vector.extract_strided_slice %386 {offsets = [0, 32], sizes = [2, 32], strides = [1, 1]} : vector<2x128xf32> to vector<2x32xf32>
    %389 = vector.extract_strided_slice %386 {offsets = [0, 64], sizes = [2, 32], strides = [1, 1]} : vector<2x128xf32> to vector<2x32xf32>
    %390 = vector.extract_strided_slice %386 {offsets = [0, 96], sizes = [2, 32], strides = [1, 1]} : vector<2x128xf32> to vector<2x32xf32>
    %391 = arith.mulf %388, %342 : vector<2x32xf32>
    %392 = arith.mulf %387, %390 : vector<2x32xf32>
    %393 = arith.addf %391, %392 : vector<2x32xf32>
    %394 = math.tanh %393 : vector<2x32xf32>
    %395 = arith.mulf %389, %394 : vector<2x32xf32>
    %396 = tpu.concatenate %395, %371 in 1 : vector<2x32xf32>, vector<2x32xf32> -> vector<2x64xf32>
    %cst_78 = arith.constant dense<0.000000e+00> : vector<2x256xf32>
    %397 = tpu.matmul %396, %0, %cst_78 {dimension_numbers = #tpu.dot_dimension_numbers<[1], [0], [0], [1], [0, 0, 1, 1], [], []>} : vector<2x64xf32>, vector<64x256xf32>, vector<2x256xf32> -> vector<2x256xf32>
    %398 = arith.addf %397, %3 : vector<2x256xf32>
    %399 = vector.extract_strided_slice %398 {offsets = [0, 0], sizes = [2, 128], strides = [1, 1]} : vector<2x256xf32> to vector<2x128xf32>
    %cst_79 = arith.constant 2.000000e+00 : f32
    %400 = vector.broadcast %cst_79 : f32 to vector<2x128xf32>
    %401 = arith.mulf %400, %399 : vector<2x128xf32>
    %402 = arith.select %12, %399, %401 : vector<2x128xi1>, vector<2x128xf32>
    %403 = arith.negf %402 : vector<2x128xf32>
    %404 = math.exp %403 : vector<2x128xf32>
    %cst_80 = arith.constant 1.000000e+00 : f32
    %405 = vector.broadcast %cst_80 : f32 to vector<2x128xf32>
    %406 = arith.addf %405, %404 : vector<2x128xf32>
    %407 = arith.divf %405, %406 : vector<2x128xf32>
    %cst_81 = arith.constant 2.000000e+00 : f32
    %408 = vector.broadcast %cst_81 : f32 to vector<2x128xf32>
    %409 = arith.mulf %408, %407 : vector<2x128xf32>
    %cst_82 = arith.constant 1.000000e+00 : f32
    %410 = vector.broadcast %cst_82 : f32 to vector<2x128xf32>
    %411 = arith.subf %409, %410 : vector<2x128xf32>
    %412 = arith.select %12, %407, %411 : vector<2x128xi1>, vector<2x128xf32>
    %413 = vector.extract_strided_slice %412 {offsets = [0, 0], sizes = [2, 32], strides = [1, 1]} : vector<2x128xf32> to vector<2x32xf32>
    %414 = vector.extract_strided_slice %412 {offsets = [0, 32], sizes = [2, 32], strides = [1, 1]} : vector<2x128xf32> to vector<2x32xf32>
    %415 = vector.extract_strided_slice %412 {offsets = [0, 64], sizes = [2, 32], strides = [1, 1]} : vector<2x128xf32> to vector<2x32xf32>
    %416 = vector.extract_strided_slice %412 {offsets = [0, 96], sizes = [2, 32], strides = [1, 1]} : vector<2x128xf32> to vector<2x32xf32>
    %417 = arith.mulf %414, %369 : vector<2x32xf32>
    %418 = arith.mulf %413, %416 : vector<2x32xf32>
    %419 = arith.addf %417, %418 : vector<2x32xf32>
    %420 = math.tanh %419 : vector<2x32xf32>
    %421 = arith.mulf %415, %420 : vector<2x32xf32>
    %c0_83 = arith.constant 0 : index
    %c0_84 = arith.constant 0 : index
    %422 = vector.load %arg5[%c0_83, %c0_84] : memref<32x6xf32, #tpu.memory_space<vmem>>, vector<32x6xf32>
    %cst_85 = arith.constant dense<0.000000e+00> : vector<2x6xf32>
    %423 = tpu.matmul %421, %422, %cst_85 {dimension_numbers = #tpu.dot_dimension_numbers<[1], [0], [0], [1], [0, 0, 1, 1], [], []>} : vector<2x32xf32>, vector<32x6xf32>, vector<2x6xf32> -> vector<2x6xf32>
    %c0_86 = arith.constant 0 : index
    %c0_87 = arith.constant 0 : index
    %424 = vector.load %arg6[%c0_86, %c0_87] : memref<1x6xf32, #tpu.memory_space<vmem>>, vector<1x6xf32>
    %425 = vector.broadcast %424 : vector<1x6xf32> to vector<2x6xf32>
    %426 = arith.addf %423, %425 : vector<2x6xf32>
    %427 = tpu.iota {dimensions = array<i32: 1>} : vector<2x6xi32>
    %c3_i32 = arith.constant 3 : i32
    %428 = vector.broadcast %c3_i32 : i32 to vector<2x6xi32>
    %429 = arith.cmpi slt, %427, %428 : vector<2x6xi32>
    %cst_88 = arith.constant 0.000000e+00 : f32
    %430 = vector.broadcast %cst_88 : f32 to vector<2x6xf32>
    %431 = arith.maximumf %426, %430 : vector<2x6xf32>
    %432 = vector.broadcast %cst_88 : f32 to vector<2x6xf32>
    %433 = arith.subf %426, %432 : vector<2x6xf32>
    %434 = arith.cmpf one, %433, %433 : vector<2x6xf32>
    %435 = vector.broadcast %cst_88 : f32 to vector<2x6xf32>
    %436 = arith.addf %426, %435 : vector<2x6xf32>
    %437 = math.absf %433 : vector<2x6xf32>
    %cst_89 = arith.constant 0.000000e+00 : f32
    %438 = vector.broadcast %cst_89 : f32 to vector<2x6xf32>
    %439 = arith.subf %438, %437 : vector<2x6xf32>
    %440 = math.exp %439 : vector<2x6xf32>
    %441 = math.log1p %440 : vector<2x6xf32>
    %442 = arith.addf %431, %441 : vector<2x6xf32>
    %443 = arith.select %434, %436, %442 : vector<2x6xi1>, vector<2x6xf32>
    %cst_90 = arith.constant 9.99999974E-5 : f32
    %444 = vector.broadcast %cst_90 : f32 to vector<2x6xf32>
    %445 = arith.addf %443, %444 : vector<2x6xf32>
    %446 = arith.select %429, %426, %445 : vector<2x6xi1>, vector<2x6xf32>
    %c0_91 = arith.constant 0 : index
    %c0_92 = arith.constant 0 : index
    %447 = vector.load %arg7[%c0_91, %c0_92] : memref<2x6xf32, #tpu.memory_space<vmem>>, vector<2x6xf32>
    tpu.vector_store %arg7[%c0_91, %c0_92], %446 {strides = array<i32>} : memref<2x6xf32, #tpu.memory_space<vmem>>, vector<2x6xf32>,
    return
  }
}

</mosaic_0001>

<llo_original>
// kernel: lstm_recognition_forward.1
$region0: #{lstm_recognition_forward.1}
  #allocation0 [shape = 'u32[]', space=smem, size = 0x4, offset = 0x4, fixed_abs, tag = 'smem constant byte address 0x4 - core index']
  #allocation1 [shape = 'u32[144,128]{1,0:T(1,128)}', space=vmem, size = 0x12000, scoped, tag = 'internal scratch']
  %s0 = inlined_call_operand.vmem [shape: f32[16,7], index: 0, kind: input, shape index: {}]
  %s1 = inlined_call_operand.hbm [shape: f32[7,128], index: 1, kind: input, shape index: {}]
  %s2 = inlined_call_operand.vmem [shape: f32[1,128], index: 2, kind: input, shape index: {}]
  %s3 = inlined_call_operand.vmem [shape: f32[64,256], index: 3, kind: input, shape index: {}]
  %s4 = inlined_call_operand.vmem [shape: f32[1,256], index: 4, kind: input, shape index: {}]
  %s5 = inlined_call_operand.vmem [shape: f32[32,6], index: 5, kind: input, shape index: {}]
  %s6 = inlined_call_operand.vmem [shape: f32[1,6], index: 6, kind: input, shape index: {}]
  %s7 = inlined_call_operand.vmem [shape: f32[2,6], index: 7, kind: output, shape index: {}]
  %s8 = sld [smem:[#allocation0]]
  $region42: #{lstm_recognition_forward.1} parent=0
    _
  %s10 = ssub.s32 1, %s8
  %s11 = scalar_select 0, %s10, %s8
  $region1: #{lstm_recognition_forward.1} parent=0
    #allocation2 [shape = 'u8[4096]{0}', space=vmem, size = 0x1000, scoped, tag = 'input window, operand 1, single buffered']
    #allocation3 [shape = 's32[1]{0}', space=sflag, size = 0x4, scoped, tag = 'scoped memory for lstm_recognition_forward.1']
    %12 = vsyncpa [#allocation3], 0
    // Predicated region
    $region2: #{lstm_recognition_forward.1} parent=1 // pred_check
      _
    $region3: #{lstm_recognition_forward.1} parent=1 // pred_check_branch
      %14 = sbr.rel (0) target = $region5
    $region4: #{lstm_recognition_forward.1} parent=1 // pred_region
      _
    $region5: #{lstm_recognition_forward.1} parent=1 // pred_fallthru
      _
    // Predicated region
    $region6: #{lstm_recognition_forward.1} parent=1 // pred_check
      _
    $region7: #{lstm_recognition_forward.1} parent=1 // pred_check_branch
      %16 = sbr.rel (0) target = $region9
    $region8: #{lstm_recognition_forward.1} parent=1 // pred_region
      %s18 = ssub.s32 128, 128
      %19 = vsyncadd [#allocation3], %s18
      %s21 = sshll.u32 [#allocation2], 4
      %s22 = int_to_ptr.vmem [resolvable:$true] %s21
      %24 = dma.hbm_to_vmem [thread:$0]  %s1, 128, %s22, [#allocation3]
    $region9: #{lstm_recognition_forward.1} parent=1 // pred_fallthru
      _
    // Predicated region
    $region10: #{lstm_recognition_forward.1} parent=1 // pred_check
      _
    $region11: #{lstm_recognition_forward.1} parent=1 // pred_check_branch
      %26 = sbr.rel (0) target = $region13
    $region12: #{lstm_recognition_forward.1} parent=1 // pred_region
      _
    $region13: #{lstm_recognition_forward.1} parent=1 // pred_fallthru
      _
    // Predicated region
    $region14: #{lstm_recognition_forward.1} parent=1 // pred_check
      _
    $region15: #{lstm_recognition_forward.1} parent=1 // pred_check_branch
      %28 = sbr.rel (0) target = $region17
    $region16: #{lstm_recognition_forward.1} parent=1 // pred_region
      _
    $region17: #{lstm_recognition_forward.1} parent=1 // pred_fallthru
      _
    // Predicated region
    $region18: #{lstm_recognition_forward.1} parent=1 // pred_check
      _
    $region19: #{lstm_recognition_forward.1} parent=1 // pred_check_branch
      %30 = sbr.rel (0) target = $region21
    $region20: #{lstm_recognition_forward.1} parent=1 // pred_region
      _
    $region21: #{lstm_recognition_forward.1} parent=1 // pred_fallthru
      _
    // Predicated region
    $region22: #{lstm_recognition_forward.1} parent=1 // pred_check
      _
    $region23: #{lstm_recognition_forward.1} parent=1 // pred_check_branch
      %32 = sbr.rel (0) target = $region25
    $region24: #{lstm_recognition_forward.1} parent=1 // pred_region
      _
    $region25: #{lstm_recognition_forward.1} parent=1 // pred_fallthru
      _
    // Predicated region
    $region26: #{lstm_recognition_forward.1} parent=1 // pred_check
      _
    $region27: #{lstm_recognition_forward.1} parent=1 // pred_check_branch
      %34 = sbr.rel (0) target = $region29
    $region28: #{lstm_recognition_forward.1} parent=1 // pred_region
      _
    $region29: #{lstm_recognition_forward.1} parent=1 // pred_fallthru
      _
    // Predicated region
    $region30: #{lstm_recognition_forward.1} parent=1 // pred_check
      _
    $region31: #{lstm_recognition_forward.1} parent=1 // pred_check_branch
      %36 = sbr.rel (0) target = $region33
    $region32: #{lstm_recognition_forward.1} parent=1 // pred_region
      %37 = dma.done [#allocation3], 128
    $region33: #{lstm_recognition_forward.1} parent=1 // pred_fallthru
      _
    %v38 = vld [vmem:[%s3] sm:$0xff]
    %v39 = vld [vmem:[%s3 + $0x8] sm:$0xff]
    %v40 = vld [vmem:[%s3 + $0x10] sm:$0xff]
    %v41 = vld [vmem:[%s3 + $0x18] sm:$0xff]
    %v42 = vld [vmem:[%s3 + $0x20] sm:$0xff]
    %v43 = vld [vmem:[%s3 + $0x28] sm:$0xff]
    %v44 = vld [vmem:[%s3 + $0x30] sm:$0xff]
    %v45 = vld [vmem:[%s3 + $0x38] sm:$0xff]
    %v46 = vld [vmem:[%s3 + $0x40] sm:$0xff]
    %v47 = vld [vmem:[%s3 + $0x48] sm:$0xff]
    %v48 = vld [vmem:[%s3 + $0x50] sm:$0xff]
    %v49 = vld [vmem:[%s3 + $0x58] sm:$0xff]
    %v50 = vld [vmem:[%s3 + $0x60] sm:$0xff]
    %v51 = vld [vmem:[%s3 + $0x68] sm:$0xff]
    %v52 = vld [vmem:[%s3 + $0x70] sm:$0xff]
    %v53 = vld [vmem:[%s3 + $0x78] sm:$0xff]
    %v54 = vld [vmem:[%s4] sm:$0x3]
    %v56 = vlaneseq
    %v57 = vshrl.u32 %v56, 7
    %v58 = vsub.s32 0, %v57
    %v59 = vrot.slane %v54, %v58
    %v60 = vlaneseq
    %v61 = vshrl.u32 %v60, 7
    %v62 = vsub.s32 1, %v61
    %v63 = vrot.slane %v54, %v62
    %v66 = vld [vmem:[%s0] sm:$0xff]
    %v67 = vld [vmem:[%s0 + $0x8] sm:$0xff]
    %v68 = vld [vmem:[#allocation2] sm:$0x7f]
    %v69 = vld [vmem:[%s2] sm:$0x1]
    %v71 = vlaneseq
    %v72 = vshrl.u32 %v71, 7
    %v73 = vsub.s32 0, %v72
    %v74 = vrot.slane %v69, %v73
    %vm76 = vcmask 56320
    %v78 = vsel %vm76, %v66, 0
    %v81 = vsel %vm76, %v67, 0
    %vm83 = vcmask 1046528
    %v85 = vsel %vm83, %v68, 0
    %87 = vmatprep.subr.mxu0 0.0
    %88 = vmatpush1.msra.mxu0 0.0
    %89 = vmatprep.subr.mxu0 0.0
    %90 = vmatpush1.msra.mxu0 0.0
    %91 = vmatprep.subr.mxu0 0.0
    %92 = vmatpush1.msra.mxu0 0.0
    %93 = vmatprep.subr.mxu0 0.0
    %94 = vmatpush1.msra.mxu0 0.0
    %95 = vmatprep.subr.mxu0 0.0
    %96 = vmatpush1.msra.mxu0 0.0
    %97 = vmatprep.subr.mxu0 0.0
    %98 = vmatpush1.msra.mxu0 0.0
    %99 = vmatprep.subr.mxu0 0.0
    %100 = vmatpush1.msra.mxu0 0.0
    %101 = vmatprep.subr.mxu0 0.0
    %102 = vmatpush1.msra.mxu0 0.0
    %103 = vmatprep.subr.mxu0 0.0
    %104 = vmatpush1.msra.mxu0 0.0
    %105 = vmatprep.subr.mxu0 0.0
    %106 = vmatpush1.msra.mxu0 0.0
    %107 = vmatprep.subr.mxu0 0.0
    %108 = vmatpush1.msra.mxu0 0.0
    %109 = vmatprep.subr.mxu0 0.0
    %110 = vmatpush1.msra.mxu0 0.0
    %111 = vmatprep.subr.mxu0 0.0
    %112 = vmatpush1.msra.mxu0 0.0
    %113 = vmatprep.subr.mxu0 0.0
    %114 = vmatpush1.msra.mxu0 0.0
    %115 = vmatprep.subr.mxu0 0.0
    %116 = vmatpush1.msra.mxu0 0.0
    %117 = vmatprep.subr.mxu0 0.0
    %118 = vmatpush1.msra.mxu0 %v85
    %119 = vmatprep.subr.mxu0 0.0
    %120 = vmatpush2.msra.mxu0 0.0
    %121 = vmatprep.subr.mxu0 0.0
    %122 = vmatpush2.msra.mxu0 0.0
    %123 = vmatprep.subr.mxu0 0.0
    %124 = vmatpush2.msra.mxu0 0.0
    %125 = vmatprep.subr.mxu0 0.0
    %126 = vmatpush2.msra.mxu0 0.0
    %127 = vmatprep.subr.mxu0 0.0
    %128 = vmatpush2.msra.mxu0 0.0
    %129 = vmatprep.subr.mxu0 0.0
    %130 = vmatpush2.msra.mxu0 0.0
    %131 = vmatprep.subr.mxu0 0.0
    %132 = vmatpush2.msra.mxu0 0.0
    %133 = vmatprep.subr.mxu0 0.0
    %134 = vmatpush2.msra.mxu0 0.0
    %135 = vmatprep.subr.mxu0 0.0
    %136 = vmatpush2.msra.mxu0 0.0
    %137 = vmatprep.subr.mxu0 0.0
    %138 = vmatpush2.msra.mxu0 0.0
    %139 = vmatprep.subr.mxu0 0.0
    %140 = vmatpush2.msra.mxu0 0.0
    %141 = vmatprep.subr.mxu0 0.0
    %142 = vmatpush2.msra.mxu0 0.0
    %143 = vmatprep.subr.mxu0 0.0
    %144 = vmatpush2.msra.mxu0 0.0
    %145 = vmatprep.subr.mxu0 0.0
    %146 = vmatpush2.msra.mxu0 0.0
    %147 = vmatprep.subr.mxu0 0.0
    %148 = vmatpush2.msra.mxu0 0.0
    %149 = vmatprep.subr.mxu0 0.0
    %150 = vmatpush2.msra.mxu0 0.0
    %151 = vmatprep.mubr.f32.mxu0 0.0
    %152 = vmatmul.mubr.f32.gmra.mxu0 %v78
    %v153 = vpop.f32.mrf.mxu0
    %v154 = vadd.f32 %v74, %v153
    %v155 = vpop.f32.mrf.mxu0
    %156 = vmatprep.mubr.f32.mxu0 0.0
    %157 = vmatmul.mubr.f32.gmra.mxu0 %v81
    %v158 = vpop.f32.mrf.mxu0
    %v159 = vadd.f32 %v74, %v158
    %v160 = vpop.f32.mrf.mxu0
    %161 = vdwg.mxu0
    %v162 = vlaneseq
    %v163 = vand.u32 %v162, 127
    %vm164 = vcmp.lt.s32.totalorder %v163, 96
    %v165 = vadd.f32 %v159, 0.0
    %v166 = vmul.f32 %v165, 2.0
    %v167 = vsel %vm164, %v165, %v166
    %v168 = vxor.u32 %v167, 2147483648
    %v169 = vmul.f32 %v168, 1.442695
    %v170 = vpow.pop %v169
    %v171 = vadd.f32 %v170, 1.0
    %v172 = vrcp.pop %v171
    %v173 = vmul.f32 1.0, %v172
    %v174 = vmul.f32 %v173, 2.0
    %v175 = vsub.f32 %v174, 1.0
    %v176 = vsel %vm164, %v173, %v175
    %v177 = vmul.f32 %v176, 0.0
    %179 = vrot.lane.b32.xlu0 %v176, 32
    %v180 = vpop.permute.xlu0 %179
    %v182 = vmul.f32 %v176, %v180
    %184 = vrot.lane.b32.xlu0 %v182, 32
    %v185 = vpop.permute.xlu0 %184
    %v187 = vadd.f32 %v177, %v185
    %v188 = vtanh.pop %v187
    %190 = vrot.lane.b32.xlu0 %v188, 32
    %v191 = vpop.permute.xlu0 %190
    %v193 = vmul.f32 %v176, %v191
    %195 = vrot.lane.b32.xlu0 %v193, 64
    %v196 = vpop.permute.xlu0 %195
    %vm198 = vcmask 261120
    %v199 = vsel %vm198, %v196, 0.0
    %v201 = vrot.slane %v199, 6
    %vm202 = vcmask 523264
    %v203 = vsel %vm202, %v201, 0
    %205 = vmatprep.subr.mxu0 0.0
    %206 = vmatpush1.msra.mxu0 0.0
    %207 = vmatprep.subr.mxu0 0.0
    %208 = vmatpush1.msra.mxu0 0.0
    %209 = vmatprep.subr.mxu0 0.0
    %210 = vmatpush1.msra.mxu0 0.0
    %211 = vmatprep.subr.mxu0 0.0
    %212 = vmatpush1.msra.mxu0 0.0
    %213 = vmatprep.subr.mxu0 0.0
    %214 = vmatpush1.msra.mxu0 0.0
    %215 = vmatprep.subr.mxu0 0.0
    %216 = vmatpush1.msra.mxu0 0.0
    %217 = vmatprep.subr.mxu0 0.0
    %218 = vmatpush1.msra.mxu0 0.0
    %219 = vmatprep.subr.mxu0 0.0
    %220 = vmatpush1.msra.mxu0 0.0
    %221 = vmatprep.subr.mxu0 %v53
    %222 = vmatpush1.msra.mxu0 %v52
    %223 = vmatprep.subr.mxu0 %v51
    %224 = vmatpush1.msra.mxu0 %v50
    %225 = vmatprep.subr.mxu0 %v49
    %226 = vmatpush1.msra.mxu0 %v48
    %227 = vmatprep.subr.mxu0 %v47
    %228 = vmatpush1.msra.mxu0 %v46
    %229 = vmatprep.subr.mxu0 %v45
    %230 = vmatpush1.msra.mxu0 %v44
    %231 = vmatprep.subr.mxu0 %v43
    %232 = vmatpush1.msra.mxu0 %v42
    %233 = vmatprep.subr.mxu0 %v41
    %234 = vmatpush1.msra.mxu0 %v40
    %235 = vmatprep.subr.mxu0 %v39
    %236 = vmatpush1.msra.mxu0 %v38
    %237 = vmatprep.subr.mxu0 0.0
    %238 = vmatpush2.msra.mxu0 0.0
    %239 = vmatprep.subr.mxu0 0.0
    %240 = vmatpush2.msra.mxu0 0.0
    %241 = vmatprep.subr.mxu0 0.0
    %242 = vmatpush2.msra.mxu0 0.0
    %243 = vmatprep.subr.mxu0 0.0
    %244 = vmatpush2.msra.mxu0 0.0
    %245 = vmatprep.subr.mxu0 0.0
    %246 = vmatpush2.msra.mxu0 0.0
    %247 = vmatprep.subr.mxu0 0.0
    %248 = vmatpush2.msra.mxu0 0.0
    %249 = vmatprep.subr.mxu0 0.0
    %250 = vmatpush2.msra.mxu0 0.0
    %251 = vmatprep.subr.mxu0 0.0
    %252 = vmatpush2.msra.mxu0 0.0
    %253 = vmatprep.subr.mxu0 0.0
    %254 = vmatpush2.msra.mxu0 0.0
    %255 = vmatprep.subr.mxu0 0.0
    %256 = vmatpush2.msra.mxu0 0.0
    %257 = vmatprep.subr.mxu0 0.0
    %258 = vmatpush2.msra.mxu0 0.0
    %259 = vmatprep.subr.mxu0 0.0
    %260 = vmatpush2.msra.mxu0 0.0
    %261 = vmatprep.subr.mxu0 0.0
    %262 = vmatpush2.msra.mxu0 0.0
    %263 = vmatprep.subr.mxu0 0.0
    %264 = vmatpush2.msra.mxu0 0.0
    %265 = vmatprep.subr.mxu0 0.0
    %266 = vmatpush2.msra.mxu0 0.0
    %267 = vmatprep.subr.mxu0 0.0
    %268 = vmatpush2.msra.mxu0 0.0
    %269 = vmatprep.mubr.f32.mxu0 0.0
    %270 = vmatmul.mubr.f32.gmra.mxu0 %v203
    %v271 = vpop.f32.mrf.mxu0
    %v272 = vadd.f32 %v59, %v271
    %v273 = vpop.f32.mrf.mxu0
    %v274 = vadd.f32 %v63, %v273
    %275 = vdwg.mxu0
    %v276 = vmul.f32 %v272, 2.0
    %v277 = vsel %vm164, %v272, %v276
    %v278 = vxor.u32 %v277, 2147483648
    %v279 = vmul.f32 %v278, 1.442695
    %v280 = vpow.pop %v279
    %v281 = vadd.f32 %v280, 1.0
    %v282 = vrcp.pop %v281
    %v283 = vmul.f32 1.0, %v282
    %v284 = vmul.f32 %v283, 2.0
    %v285 = vsub.f32 %v284, 1.0
    %v286 = vsel %vm164, %v283, %v285
    %v287 = vmul.f32 %v286, 0.0
    %289 = vrot.lane.b32.xlu0 %v286, 32
    %v290 = vpop.permute.xlu0 %289
    %v292 = vmul.f32 %v286, %v290
    %294 = vrot.lane.b32.xlu0 %v292, 32
    %v295 = vpop.permute.xlu0 %294
    %v297 = vadd.f32 %v287, %v295
    %v298 = vtanh.pop %v297
    %300 = vrot.lane.b32.xlu0 %v298, 32
    %v301 = vpop.permute.xlu0 %300
    %v303 = vmul.f32 %v286, %v301
    %v305 = vrot.slane %v274, 4
    %v307 = vadd.f32 %v159, %v305
    %v308 = vmul.f32 %v307, 2.0
    %v309 = vsel %vm164, %v307, %v308
    %v310 = vxor.u32 %v309, 2147483648
    %v311 = vmul.f32 %v310, 1.442695
    %v312 = vpow.pop %v311
    %v313 = vadd.f32 %v312, 1.0
    %v314 = vrcp.pop %v313
    %v315 = vmul.f32 1.0, %v314
    %v316 = vmul.f32 %v315, 2.0
    %v317 = vsub.f32 %v316, 1.0
    %v318 = vsel %vm164, %v315, %v317
    %v320 = vrot.slane %v187, 2
    %v322 = vmul.f32 %v318, %v320
    %324 = vrot.lane.b32.xlu0 %v318, 32
    %v325 = vpop.permute.xlu0 %324
    %v327 = vmul.f32 %v318, %v325
    %329 = vrot.lane.b32.xlu0 %v327, 32
    %v330 = vpop.permute.xlu0 %329
    %v332 = vadd.f32 %v322, %v330
    %v333 = vtanh.pop %v332
    %335 = vrot.lane.b32.xlu0 %v333, 32
    %v336 = vpop.permute.xlu0 %335
    %v338 = vmul.f32 %v318, %v336
    %340 = vrot.lane.b32.xlu0 %v338, 64
    %v341 = vpop.permute.xlu0 %340
    %v344 = vrot.slane %v303, 4
    %345 = vrot.lane.b32.xlu0 %v344, 96
    %v346 = vpop.permute.xlu0 %345
    %v348 = vsel %vm198, %v341, %v346
    %v350 = vrot.slane %v348, 4
    %v351 = vsel %vm202, %v350, 0
    %353 = vmatprep.subr.mxu0 0.0
    %354 = vmatpush1.msra.mxu0 0.0
    %355 = vmatprep.subr.mxu0 0.0
    %356 = vmatpush1.msra.mxu0 0.0
    %357 = vmatprep.subr.mxu0 0.0
    %358 = vmatpush1.msra.mxu0 0.0
    %359 = vmatprep.subr.mxu0 0.0
    %360 = vmatpush1.msra.mxu0 0.0
    %361 = vmatprep.subr.mxu0 0.0
    %362 = vmatpush1.msra.mxu0 0.0
    %363 = vmatprep.subr.mxu0 0.0
    %364 = vmatpush1.msra.mxu0 0.0
    %365 = vmatprep.subr.mxu0 0.0
    %366 = vmatpush1.msra.mxu0 0.0
    %367 = vmatprep.subr.mxu0 0.0
    %368 = vmatpush1.msra.mxu0 0.0
    %369 = vmatprep.subr.mxu0 %v53
    %370 = vmatpush1.msra.mxu0 %v52
    %371 = vmatprep.subr.mxu0 %v51
    %372 = vmatpush1.msra.mxu0 %v50
    %373 = vmatprep.subr.mxu0 %v49
    %374 = vmatpush1.msra.mxu0 %v48
    %375 = vmatprep.subr.mxu0 %v47
    %376 = vmatpush1.msra.mxu0 %v46
    %377 = vmatprep.subr.mxu0 %v45
    %378 = vmatpush1.msra.mxu0 %v44
    %379 = vmatprep.subr.mxu0 %v43
    %380 = vmatpush1.msra.mxu0 %v42
    %381 = vmatprep.subr.mxu0 %v41
    %382 = vmatpush1.msra.mxu0 %v40
    %383 = vmatprep.subr.mxu0 %v39
    %384 = vmatpush1.msra.mxu0 %v38
    %385 = vmatprep.subr.mxu0 0.0
    %386 = vmatpush2.msra.mxu0 0.0
    %387 = vmatprep.subr.mxu0 0.0
    %388 = vmatpush2.msra.mxu0 0.0
    %389 = vmatprep.subr.mxu0 0.0
    %390 = vmatpush2.msra.mxu0 0.0
    %391 = vmatprep.subr.mxu0 0.0
    %392 = vmatpush2.msra.mxu0 0.0
    %393 = vmatprep.subr.mxu0 0.0
    %394 = vmatpush2.msra.mxu0 0.0
    %395 = vmatprep.subr.mxu0 0.0
    %396 = vmatpush2.msra.mxu0 0.0
    %397 = vmatprep.subr.mxu0 0.0
    %398 = vmatpush2.msra.mxu0 0.0
    %399 = vmatprep.subr.mxu0 0.0
    %400 = vmatpush2.msra.mxu0 0.0
    %401 = vmatprep.subr.mxu0 0.0
    %402 = vmatpush2.msra.mxu0 0.0
    %403 = vmatprep.subr.mxu0 0.0
    %404 = vmatpush2.msra.mxu0 0.0
    %405 = vmatprep.subr.mxu0 0.0
    %406 = vmatpush2.msra.mxu0 0.0
    %407 = vmatprep.subr.mxu0 0.0
    %408 = vmatpush2.msra.mxu0 0.0
    %409 = vmatprep.subr.mxu0 0.0
    %410 = vmatpush2.msra.mxu0 0.0
    %411 = vmatprep.subr.mxu0 0.0
    %412 = vmatpush2.msra.mxu0 0.0
    %413 = vmatprep.subr.mxu0 0.0
    %414 = vmatpush2.msra.mxu0 0.0
    %415 = vmatprep.subr.mxu0 0.0
    %416 = vmatpush2.msra.mxu0 0.0
    %417 = vmatprep.mubr.f32.mxu0 0.0
    %418 = vmatmul.mubr.f32.gmra.mxu0 %v351
    %v419 = vpop.f32.mrf.mxu0
    %v420 = vadd.f32 %v59, %v419
    %v421 = vpop.f32.mrf.mxu0
    %v422 = vadd.f32 %v63, %v421
    %423 = vdwg.mxu0
    %v424 = vmul.f32 %v420, 2.0
    %v425 = vsel %vm164, %v420, %v424
    %v426 = vxor.u32 %v425, 2147483648
    %v427 = vmul.f32 %v426, 1.442695
    %v428 = vpow.pop %v427
    %v429 = vadd.f32 %v428, 1.0
    %v430 = vrcp.pop %v429
    %v431 = vmul.f32 1.0, %v430
    %v432 = vmul.f32 %v431, 2.0
    %v433 = vsub.f32 %v432, 1.0
    %v434 = vsel %vm164, %v431, %v433
    %v435 = vmul.f32 %v434, %v297
    %437 = vrot.lane.b32.xlu0 %v434, 32
    %v438 = vpop.permute.xlu0 %437
    %v440 = vmul.f32 %v434, %v438
    %442 = vrot.lane.b32.xlu0 %v440, 32
    %v443 = vpop.permute.xlu0 %442
    %v445 = vadd.f32 %v435, %v443
    %v446 = vtanh.pop %v445
    %448 = vrot.lane.b32.xlu0 %v446, 32
    %v449 = vpop.permute.xlu0 %448
    %v451 = vmul.f32 %v434, %v449
    %v453 = vrot.slane %v422, 6
    %v455 = vadd.f32 %v159, %v453
    %v456 = vmul.f32 %v455, 2.0
    %v457 = vsel %vm164, %v455, %v456
    %v458 = vxor.u32 %v457, 2147483648
    %v459 = vmul.f32 %v458, 1.442695
    %v460 = vpow.pop %v459
    %v461 = vadd.f32 %v460, 1.0
    %v462 = vrcp.pop %v461
    %v463 = vmul.f32 1.0, %v462
    %v464 = vmul.f32 %v463, 2.0
    %v465 = vsub.f32 %v464, 1.0
    %v466 = vsel %vm164, %v463, %v465
    %v468 = vrot.slane %v332, 2
    %v470 = vmul.f32 %v466, %v468
    %472 = vrot.lane.b32.xlu0 %v466, 32
    %v473 = vpop.permute.xlu0 %472
    %v475 = vmul.f32 %v466, %v473
    %477 = vrot.lane.b32.xlu0 %v475, 32
    %v478 = vpop.permute.xlu0 %477
    %v480 = vadd.f32 %v470, %v478
    %v481 = vtanh.pop %v480
    %483 = vrot.lane.b32.xlu0 %v481, 32
    %v484 = vpop.permute.xlu0 %483
    %v486 = vmul.f32 %v466, %v484
    %488 = vrot.lane.b32.xlu0 %v486, 64
    %v489 = vpop.permute.xlu0 %488
    %v492 = vrot.slane %v451, 6
    %493 = vrot.lane.b32.xlu0 %v492, 96
    %v494 = vpop.permute.xlu0 %493
    %v496 = vsel %vm198, %v489, %v494
    %v498 = vrot.slane %v496, 2
    %v499 = vsel %vm202, %v498, 0
    %501 = vmatprep.subr.mxu0 0.0
    %502 = vmatpush1.msra.mxu0 0.0
    %503 = vmatprep.subr.mxu0 0.0
    %504 = vmatpush1.msra.mxu0 0.0
    %505 = vmatprep.subr.mxu0 0.0
    %506 = vmatpush1.msra.mxu0 0.0
    %507 = vmatprep.subr.mxu0 0.0
    %508 = vmatpush1.msra.mxu0 0.0
    %509 = vmatprep.subr.mxu0 0.0
    %510 = vmatpush1.msra.mxu0 0.0
    %511 = vmatprep.subr.mxu0 0.0
    %512 = vmatpush1.msra.mxu0 0.0
    %513 = vmatprep.subr.mxu0 0.0
    %514 = vmatpush1.msra.mxu0 0.0
    %515 = vmatprep.subr.mxu0 0.0
    %516 = vmatpush1.msra.mxu0 0.0
    %517 = vmatprep.subr.mxu0 %v53
    %518 = vmatpush1.msra.mxu0 %v52
    %519 = vmatprep.subr.mxu0 %v51
    %520 = vmatpush1.msra.mxu0 %v50
    %521 = vmatprep.subr.mxu0 %v49
    %522 = vmatpush1.msra.mxu0 %v48
    %523 = vmatprep.subr.mxu0 %v47
    %524 = vmatpush1.msra.mxu0 %v46
    %525 = vmatprep.subr.mxu0 %v45
    %526 = vmatpush1.msra.mxu0 %v44
    %527 = vmatprep.subr.mxu0 %v43
    %528 = vmatpush1.msra.mxu0 %v42
    %529 = vmatprep.subr.mxu0 %v41
    %530 = vmatpush1.msra.mxu0 %v40
    %531 = vmatprep.subr.mxu0 %v39
    %532 = vmatpush1.msra.mxu0 %v38
    %533 = vmatprep.subr.mxu0 0.0
    %534 = vmatpush2.msra.mxu0 0.0
    %535 = vmatprep.subr.mxu0 0.0
    %536 = vmatpush2.msra.mxu0 0.0
    %537 = vmatprep.subr.mxu0 0.0
    %538 = vmatpush2.msra.mxu0 0.0
    %539 = vmatprep.subr.mxu0 0.0
    %540 = vmatpush2.msra.mxu0 0.0
    %541 = vmatprep.subr.mxu0 0.0
    %542 = vmatpush2.msra.mxu0 0.0
    %543 = vmatprep.subr.mxu0 0.0
    %544 = vmatpush2.msra.mxu0 0.0
    %545 = vmatprep.subr.mxu0 0.0
    %546 = vmatpush2.msra.mxu0 0.0
    %547 = vmatprep.subr.mxu0 0.0
    %548 = vmatpush2.msra.mxu0 0.0
    %549 = vmatprep.subr.mxu0 0.0
    %550 = vmatpush2.msra.mxu0 0.0
    %551 = vmatprep.subr.mxu0 0.0
    %552 = vmatpush2.msra.mxu0 0.0
    %553 = vmatprep.subr.mxu0 0.0
    %554 = vmatpush2.msra.mxu0 0.0
    %555 = vmatprep.subr.mxu0 0.0
    %556 = vmatpush2.msra.mxu0 0.0
    %557 = vmatprep.subr.mxu0 0.0
    %558 = vmatpush2.msra.mxu0 0.0
    %559 = vmatprep.subr.mxu0 0.0
    %560 = vmatpush2.msra.mxu0 0.0
    %561 = vmatprep.subr.mxu0 0.0
    %562 = vmatpush2.msra.mxu0 0.0
    %563 = vmatprep.subr.mxu0 0.0
    %564 = vmatpush2.msra.mxu0 0.0
    %565 = vmatprep.mubr.f32.mxu0 0.0
    %566 = vmatmul.mubr.f32.gmra.mxu0 %v499
    %v567 = vpop.f32.mrf.mxu0
    %v568 = vadd.f32 %v59, %v567
    %v569 = vpop.f32.mrf.mxu0
    %v570 = vadd.f32 %v63, %v569
    %571 = vdwg.mxu0
    %v572 = vmul.f32 %v568, 2.0
    %v573 = vsel %vm164, %v568, %v572
    %v574 = vxor.u32 %v573, 2147483648
    %v575 = vmul.f32 %v574, 1.442695
    %v576 = vpow.pop %v575
    %v577 = vadd.f32 %v576, 1.0
    %v578 = vrcp.pop %v577
    %v579 = vmul.f32 1.0, %v578
    %v580 = vmul.f32 %v579, 2.0
    %v581 = vsub.f32 %v580, 1.0
    %v582 = vsel %vm164, %v579, %v581
    %v583 = vmul.f32 %v582, %v445
    %585 = vrot.lane.b32.xlu0 %v582, 32
    %v586 = vpop.permute.xlu0 %585
    %v588 = vmul.f32 %v582, %v586
    %590 = vrot.lane.b32.xlu0 %v588, 32
    %v591 = vpop.permute.xlu0 %590
    %v593 = vadd.f32 %v583, %v591
    %v594 = vtanh.pop %v593
    %596 = vrot.lane.b32.xlu0 %v594, 32
    %v597 = vpop.permute.xlu0 %596
    %v599 = vmul.f32 %v582, %v597
    %v600 = vadd.f32 %v159, %v570
    %v601 = vmul.f32 %v600, 2.0
    %v602 = vsel %vm164, %v600, %v601
    %v603 = vxor.u32 %v602, 2147483648
    %v604 = vmul.f32 %v603, 1.442695
    %v605 = vpow.pop %v604
    %v606 = vadd.f32 %v605, 1.0
    %v607 = vrcp.pop %v606
    %v608 = vmul.f32 1.0, %v607
    %v609 = vmul.f32 %v608, 2.0
    %v610 = vsub.f32 %v609, 1.0
    %v611 = vsel %vm164, %v608, %v610
    %v613 = vrot.slane %v480, 2
    %v615 = vmul.f32 %v611, %v613
    %617 = vrot.lane.b32.xlu0 %v611, 32
    %v618 = vpop.permute.xlu0 %617
    %v620 = vmul.f32 %v611, %v618
    %622 = vrot.lane.b32.xlu0 %v620, 32
    %v623 = vpop.permute.xlu0 %622
    %v625 = vadd.f32 %v615, %v623
    %v626 = vtanh.pop %v625
    %628 = vrot.lane.b32.xlu0 %v626, 32
    %v629 = vpop.permute.xlu0 %628
    %v631 = vmul.f32 %v611, %v629
    %633 = vrot.lane.b32.xlu0 %v631, 64
    %v634 = vpop.permute.xlu0 %633
    %637 = vrot.lane.b32.xlu0 %v599, 96
    %v638 = vpop.permute.xlu0 %637
    %v640 = vsel %vm198, %v634, %v638
    %v642 = vsel %vm202, %v640, 0
    %644 = vmatprep.subr.mxu0 0.0
    %645 = vmatpush1.msra.mxu0 0.0
    %646 = vmatprep.subr.mxu0 0.0
    %647 = vmatpush1.msra.mxu0 0.0
    %648 = vmatprep.subr.mxu0 0.0
    %649 = vmatpush1.msra.mxu0 0.0
    %650 = vmatprep.subr.mxu0 0.0
    %651 = vmatpush1.msra.mxu0 0.0
    %652 = vmatprep.subr.mxu0 0.0
    %653 = vmatpush1.msra.mxu0 0.0
    %654 = vmatprep.subr.mxu0 0.0
    %655 = vmatpush1.msra.mxu0 0.0
    %656 = vmatprep.subr.mxu0 0.0
    %657 = vmatpush1.msra.mxu0 0.0
    %658 = vmatprep.subr.mxu0 0.0
    %659 = vmatpush1.msra.mxu0 0.0
    %660 = vmatprep.subr.mxu0 %v53
    %661 = vmatpush1.msra.mxu0 %v52
    %662 = vmatprep.subr.mxu0 %v51
    %663 = vmatpush1.msra.mxu0 %v50
    %664 = vmatprep.subr.mxu0 %v49
    %665 = vmatpush1.msra.mxu0 %v48
    %666 = vmatprep.subr.mxu0 %v47
    %667 = vmatpush1.msra.mxu0 %v46
    %668 = vmatprep.subr.mxu0 %v45
    %669 = vmatpush1.msra.mxu0 %v44
    %670 = vmatprep.subr.mxu0 %v43
    %671 = vmatpush1.msra.mxu0 %v42
    %672 = vmatprep.subr.mxu0 %v41
    %673 = vmatpush1.msra.mxu0 %v40
    %674 = vmatprep.subr.mxu0 %v39
    %675 = vmatpush1.msra.mxu0 %v38
    %676 = vmatprep.subr.mxu0 0.0
    %677 = vmatpush2.msra.mxu0 0.0
    %678 = vmatprep.subr.mxu0 0.0
    %679 = vmatpush2.msra.mxu0 0.0
    %680 = vmatprep.subr.mxu0 0.0
    %681 = vmatpush2.msra.mxu0 0.0
    %682 = vmatprep.subr.mxu0 0.0
    %683 = vmatpush2.msra.mxu0 0.0
    %684 = vmatprep.subr.mxu0 0.0
    %685 = vmatpush2.msra.mxu0 0.0
    %686 = vmatprep.subr.mxu0 0.0
    %687 = vmatpush2.msra.mxu0 0.0
    %688 = vmatprep.subr.mxu0 0.0
    %689 = vmatpush2.msra.mxu0 0.0
    %690 = vmatprep.subr.mxu0 0.0
    %691 = vmatpush2.msra.mxu0 0.0
    %692 = vmatprep.subr.mxu0 0.0
    %693 = vmatpush2.msra.mxu0 0.0
    %694 = vmatprep.subr.mxu0 0.0
    %695 = vmatpush2.msra.mxu0 0.0
    %696 = vmatprep.subr.mxu0 0.0
    %697 = vmatpush2.msra.mxu0 0.0
    %698 = vmatprep.subr.mxu0 0.0
    %699 = vmatpush2.msra.mxu0 0.0
    %700 = vmatprep.subr.mxu0 0.0
    %701 = vmatpush2.msra.mxu0 0.0
    %702 = vmatprep.subr.mxu0 0.0
    %703 = vmatpush2.msra.mxu0 0.0
    %704 = vmatprep.subr.mxu0 0.0
    %705 = vmatpush2.msra.mxu0 0.0
    %706 = vmatprep.subr.mxu0 0.0
    %707 = vmatpush2.msra.mxu0 0.0
    %708 = vmatprep.mubr.f32.mxu0 0.0
    %709 = vmatmul.mubr.f32.gmra.mxu0 %v642
    %v710 = vpop.f32.mrf.mxu0
    %v711 = vadd.f32 %v59, %v710
    %v712 = vpop.f32.mrf.mxu0
    %v713 = vadd.f32 %v63, %v712
    %714 = vdwg.mxu0
    %v715 = vmul.f32 %v711, 2.0
    %v716 = vsel %vm164, %v711, %v715
    %v717 = vxor.u32 %v716, 2147483648
    %v718 = vmul.f32 %v717, 1.442695
    %v719 = vpow.pop %v718
    %v720 = vadd.f32 %v719, 1.0
    %v721 = vrcp.pop %v720
    %v722 = vmul.f32 1.0, %v721
    %v723 = vmul.f32 %v722, 2.0
    %v724 = vsub.f32 %v723, 1.0
    %v725 = vsel %vm164, %v722, %v724
    %v726 = vmul.f32 %v725, %v593
    %728 = vrot.lane.b32.xlu0 %v725, 32
    %v729 = vpop.permute.xlu0 %728
    %v731 = vmul.f32 %v725, %v729
    %733 = vrot.lane.b32.xlu0 %v731, 32
    %v734 = vpop.permute.xlu0 %733
    %v736 = vadd.f32 %v726, %v734
    %v737 = vtanh.pop %v736
    %739 = vrot.lane.b32.xlu0 %v737, 32
    %v740 = vpop.permute.xlu0 %739
    %v742 = vmul.f32 %v725, %v740
    %v744 = vrot.slane %v713, 2
    %v746 = vadd.f32 %v154, %v744
    %v747 = vmul.f32 %v746, 2.0
    %v748 = vsel %vm164, %v746, %v747
    %v749 = vxor.u32 %v748, 2147483648
    %v750 = vmul.f32 %v749, 1.442695
    %v751 = vpow.pop %v750
    %v752 = vadd.f32 %v751, 1.0
    %v753 = vrcp.pop %v752
    %v754 = vmul.f32 1.0, %v753
    %v755 = vmul.f32 %v754, 2.0
    %v756 = vsub.f32 %v755, 1.0
    %v757 = vsel %vm164, %v754, %v756
    %v759 = vrot.slane %v625, 2
    %v761 = vmul.f32 %v757, %v759
    %763 = vrot.lane.b32.xlu0 %v757, 32
    %v764 = vpop.permute.xlu0 %763
    %v766 = vmul.f32 %v757, %v764
    %768 = vrot.lane.b32.xlu0 %v766, 32
    %v769 = vpop.permute.xlu0 %768
    %v771 = vadd.f32 %v761, %v769
    %v772 = vtanh.pop %v771
    %774 = vrot.lane.b32.xlu0 %v772, 32
    %v775 = vpop.permute.xlu0 %774
    %v777 = vmul.f32 %v757, %v775
    %779 = vrot.lane.b32.xlu0 %v777, 64
    %v780 = vpop.permute.xlu0 %779
    %v783 = vrot.slane %v742, 2
    %784 = vrot.lane.b32.xlu0 %v783, 96
    %v785 = vpop.permute.xlu0 %784
    %v787 = vsel %vm198, %v780, %v785
    %v789 = vrot.slane %v787, 6
    %v790 = vsel %vm202, %v789, 0
    %792 = vmatprep.subr.mxu0 0.0
    %793 = vmatpush1.msra.mxu0 0.0
    %794 = vmatprep.subr.mxu0 0.0
    %795 = vmatpush1.msra.mxu0 0.0
    %796 = vmatprep.subr.mxu0 0.0
    %797 = vmatpush1.msra.mxu0 0.0
    %798 = vmatprep.subr.mxu0 0.0
    %799 = vmatpush1.msra.mxu0 0.0
    %800 = vmatprep.subr.mxu0 0.0
    %801 = vmatpush1.msra.mxu0 0.0
    %802 = vmatprep.subr.mxu0 0.0
    %803 = vmatpush1.msra.mxu0 0.0
    %804 = vmatprep.subr.mxu0 0.0
    %805 = vmatpush1.msra.mxu0 0.0
    %806 = vmatprep.subr.mxu0 0.0
    %807 = vmatpush1.msra.mxu0 0.0
    %808 = vmatprep.subr.mxu0 %v53
    %809 = vmatpush1.msra.mxu0 %v52
    %810 = vmatprep.subr.mxu0 %v51
    %811 = vmatpush1.msra.mxu0 %v50
    %812 = vmatprep.subr.mxu0 %v49
    %813 = vmatpush1.msra.mxu0 %v48
    %814 = vmatprep.subr.mxu0 %v47
    %815 = vmatpush1.msra.mxu0 %v46
    %816 = vmatprep.subr.mxu0 %v45
    %817 = vmatpush1.msra.mxu0 %v44
    %818 = vmatprep.subr.mxu0 %v43
    %819 = vmatpush1.msra.mxu0 %v42
    %820 = vmatprep.subr.mxu0 %v41
    %821 = vmatpush1.msra.mxu0 %v40
    %822 = vmatprep.subr.mxu0 %v39
    %823 = vmatpush1.msra.mxu0 %v38
    %824 = vmatprep.subr.mxu0 0.0
    %825 = vmatpush2.msra.mxu0 0.0
    %826 = vmatprep.subr.mxu0 0.0
    %827 = vmatpush2.msra.mxu0 0.0
    %828 = vmatprep.subr.mxu0 0.0
    %829 = vmatpush2.msra.mxu0 0.0
    %830 = vmatprep.subr.mxu0 0.0
    %831 = vmatpush2.msra.mxu0 0.0
    %832 = vmatprep.subr.mxu0 0.0
    %833 = vmatpush2.msra.mxu0 0.0
    %834 = vmatprep.subr.mxu0 0.0
    %835 = vmatpush2.msra.mxu0 0.0
    %836 = vmatprep.subr.mxu0 0.0
    %837 = vmatpush2.msra.mxu0 0.0
    %838 = vmatprep.subr.mxu0 0.0
    %839 = vmatpush2.msra.mxu0 0.0
    %840 = vmatprep.subr.mxu0 0.0
    %841 = vmatpush2.msra.mxu0 0.0
    %842 = vmatprep.subr.mxu0 0.0
    %843 = vmatpush2.msra.mxu0 0.0
    %844 = vmatprep.subr.mxu0 0.0
    %845 = vmatpush2.msra.mxu0 0.0
    %846 = vmatprep.subr.mxu0 0.0
    %847 = vmatpush2.msra.mxu0 0.0
    %848 = vmatprep.subr.mxu0 0.0
    %849 = vmatpush2.msra.mxu0 0.0
    %850 = vmatprep.subr.mxu0 0.0
    %851 = vmatpush2.msra.mxu0 0.0
    %852 = vmatprep.subr.mxu0 0.0
    %853 = vmatpush2.msra.mxu0 0.0
    %854 = vmatprep.subr.mxu0 0.0
    %855 = vmatpush2.msra.mxu0 0.0
    %856 = vmatprep.mubr.f32.mxu0 0.0
    %857 = vmatmul.mubr.f32.gmra.mxu0 %v790
    %v858 = vpop.f32.mrf.mxu0
    %v859 = vadd.f32 %v59, %v858
    %v860 = vpop.f32.mrf.mxu0
    %v861 = vadd.f32 %v63, %v860
    %862 = vdwg.mxu0
    %v863 = vmul.f32 %v859, 2.0
    %v864 = vsel %vm164, %v859, %v863
    %v865 = vxor.u32 %v864, 2147483648
    %v866 = vmul.f32 %v865, 1.442695
    %v867 = vpow.pop %v866
    %v868 = vadd.f32 %v867, 1.0
    %v869 = vrcp.pop %v868
    %v870 = vmul.f32 1.0, %v869
    %v871 = vmul.f32 %v870, 2.0
    %v872 = vsub.f32 %v871, 1.0
    %v873 = vsel %vm164, %v870, %v872
    %v874 = vmul.f32 %v873, %v736
    %876 = vrot.lane.b32.xlu0 %v873, 32
    %v877 = vpop.permute.xlu0 %876
    %v879 = vmul.f32 %v873, %v877
    %881 = vrot.lane.b32.xlu0 %v879, 32
    %v882 = vpop.permute.xlu0 %881
    %v884 = vadd.f32 %v874, %v882
    %v885 = vtanh.pop %v884
    %887 = vrot.lane.b32.xlu0 %v885, 32
    %v888 = vpop.permute.xlu0 %887
    %v890 = vmul.f32 %v873, %v888
    %v892 = vrot.slane %v861, 4
    %v894 = vadd.f32 %v154, %v892
    %v895 = vmul.f32 %v894, 2.0
    %v896 = vsel %vm164, %v894, %v895
    %v897 = vxor.u32 %v896, 2147483648
    %v898 = vmul.f32 %v897, 1.442695
    %v899 = vpow.pop %v898
    %v900 = vadd.f32 %v899, 1.0
    %v901 = vrcp.pop %v900
    %v902 = vmul.f32 1.0, %v901
    %v903 = vmul.f32 %v902, 2.0
    %v904 = vsub.f32 %v903, 1.0
    %v905 = vsel %vm164, %v902, %v904
    %v907 = vrot.slane %v771, 2
    %v909 = vmul.f32 %v905, %v907
    %911 = vrot.lane.b32.xlu0 %v905, 32
    %v912 = vpop.permute.xlu0 %911
    %v914 = vmul.f32 %v905, %v912
    %916 = vrot.lane.b32.xlu0 %v914, 32
    %v917 = vpop.permute.xlu0 %916
    %v919 = vadd.f32 %v909, %v917
    %v920 = vtanh.pop %v919
    %922 = vrot.lane.b32.xlu0 %v920, 32
    %v923 = vpop.permute.xlu0 %922
    %v925 = vmul.f32 %v905, %v923
    %927 = vrot.lane.b32.xlu0 %v925, 64
    %v928 = vpop.permute.xlu0 %927
    %v931 = vrot.slane %v890, 4
    %932 = vrot.lane.b32.xlu0 %v931, 96
    %v933 = vpop.permute.xlu0 %932
    %v935 = vsel %vm198, %v928, %v933
    %v937 = vrot.slane %v935, 4
    %v938 = vsel %vm202, %v937, 0
    %940 = vmatprep.subr.mxu0 0.0
    %941 = vmatpush1.msra.mxu0 0.0
    %942 = vmatprep.subr.mxu0 0.0
    %943 = vmatpush1.msra.mxu0 0.0
    %944 = vmatprep.subr.mxu0 0.0
    %945 = vmatpush1.msra.mxu0 0.0
    %946 = vmatprep.subr.mxu0 0.0
    %947 = vmatpush1.msra.mxu0 0.0
    %948 = vmatprep.subr.mxu0 0.0
    %949 = vmatpush1.msra.mxu0 0.0
    %950 = vmatprep.subr.mxu0 0.0
    %951 = vmatpush1.msra.mxu0 0.0
    %952 = vmatprep.subr.mxu0 0.0
    %953 = vmatpush1.msra.mxu0 0.0
    %954 = vmatprep.subr.mxu0 0.0
    %955 = vmatpush1.msra.mxu0 0.0
    %956 = vmatprep.subr.mxu0 %v53
    %957 = vmatpush1.msra.mxu0 %v52
    %958 = vmatprep.subr.mxu0 %v51
    %959 = vmatpush1.msra.mxu0 %v50
    %960 = vmatprep.subr.mxu0 %v49
    %961 = vmatpush1.msra.mxu0 %v48
    %962 = vmatprep.subr.mxu0 %v47
    %963 = vmatpush1.msra.mxu0 %v46
    %964 = vmatprep.subr.mxu0 %v45
    %965 = vmatpush1.msra.mxu0 %v44
    %966 = vmatprep.subr.mxu0 %v43
    %967 = vmatpush1.msra.mxu0 %v42
    %968 = vmatprep.subr.mxu0 %v41
    %969 = vmatpush1.msra.mxu0 %v40
    %970 = vmatprep.subr.mxu0 %v39
    %971 = vmatpush1.msra.mxu0 %v38
    %972 = vmatprep.subr.mxu0 0.0
    %973 = vmatpush2.msra.mxu0 0.0
    %974 = vmatprep.subr.mxu0 0.0
    %975 = vmatpush2.msra.mxu0 0.0
    %976 = vmatprep.subr.mxu0 0.0
    %977 = vmatpush2.msra.mxu0 0.0
    %978 = vmatprep.subr.mxu0 0.0
    %979 = vmatpush2.msra.mxu0 0.0
    %980 = vmatprep.subr.mxu0 0.0
    %981 = vmatpush2.msra.mxu0 0.0
    %982 = vmatprep.subr.mxu0 0.0
    %983 = vmatpush2.msra.mxu0 0.0
    %984 = vmatprep.subr.mxu0 0.0
    %985 = vmatpush2.msra.mxu0 0.0
    %986 = vmatprep.subr.mxu0 0.0
    %987 = vmatpush2.msra.mxu0 0.0
    %988 = vmatprep.subr.mxu0 0.0
    %989 = vmatpush2.msra.mxu0 0.0
    %990 = vmatprep.subr.mxu0 0.0
    %991 = vmatpush2.msra.mxu0 0.0
    %992 = vmatprep.subr.mxu0 0.0
    %993 = vmatpush2.msra.mxu0 0.0
    %994 = vmatprep.subr.mxu0 0.0
    %995 = vmatpush2.msra.mxu0 0.0
    %996 = vmatprep.subr.mxu0 0.0
    %997 = vmatpush2.msra.mxu0 0.0
    %998 = vmatprep.subr.mxu0 0.0
    %999 = vmatpush2.msra.mxu0 0.0
    %1000 = vmatprep.subr.mxu0 0.0
    %1001 = vmatpush2.msra.mxu0 0.0
    %1002 = vmatprep.subr.mxu0 0.0
    %1003 = vmatpush2.msra.mxu0 0.0
    %1004 = vmatprep.mubr.f32.mxu0 0.0
    %1005 = vmatmul.mubr.f32.gmra.mxu0 %v938
    %v1006 = vpop.f32.mrf.mxu0
    %v1007 = vadd.f32 %v59, %v1006
    %v1008 = vpop.f32.mrf.mxu0
    %v1009 = vadd.f32 %v63, %v1008
    %1010 = vdwg.mxu0
    %v1011 = vmul.f32 %v1007, 2.0
    %v1012 = vsel %vm164, %v1007, %v1011
    %v1013 = vxor.u32 %v1012, 2147483648
    %v1014 = vmul.f32 %v1013, 1.442695
    %v1015 = vpow.pop %v1014
    %v1016 = vadd.f32 %v1015, 1.0
    %v1017 = vrcp.pop %v1016
    %v1018 = vmul.f32 1.0, %v1017
    %v1019 = vmul.f32 %v1018, 2.0
    %v1020 = vsub.f32 %v1019, 1.0
    %v1021 = vsel %vm164, %v1018, %v1020
    %v1022 = vmul.f32 %v1021, %v884
    %1024 = vrot.lane.b32.xlu0 %v1021, 32
    %v1025 = vpop.permute.xlu0 %1024
    %v1027 = vmul.f32 %v1021, %v1025
    %1029 = vrot.lane.b32.xlu0 %v1027, 32
    %v1030 = vpop.permute.xlu0 %1029
    %v1032 = vadd.f32 %v1022, %v1030
    %v1033 = vtanh.pop %v1032
    %1035 = vrot.lane.b32.xlu0 %v1033, 32
    %v1036 = vpop.permute.xlu0 %1035
    %v1038 = vmul.f32 %v1021, %v1036
    %v1040 = vrot.slane %v1009, 6
    %v1042 = vadd.f32 %v154, %v1040
    %v1043 = vmul.f32 %v1042, 2.0
    %v1044 = vsel %vm164, %v1042, %v1043
    %v1045 = vxor.u32 %v1044, 2147483648
    %v1046 = vmul.f32 %v1045, 1.442695
    %v1047 = vpow.pop %v1046
    %v1048 = vadd.f32 %v1047, 1.0
    %v1049 = vrcp.pop %v1048
    %v1050 = vmul.f32 1.0, %v1049
    %v1051 = vmul.f32 %v1050, 2.0
    %v1052 = vsub.f32 %v1051, 1.0
    %v1053 = vsel %vm164, %v1050, %v1052
    %v1055 = vrot.slane %v919, 2
    %v1057 = vmul.f32 %v1053, %v1055
    %1059 = vrot.lane.b32.xlu0 %v1053, 32
    %v1060 = vpop.permute.xlu0 %1059
    %v1062 = vmul.f32 %v1053, %v1060
    %1064 = vrot.lane.b32.xlu0 %v1062, 32
    %v1065 = vpop.permute.xlu0 %1064
    %v1067 = vadd.f32 %v1057, %v1065
    %v1068 = vtanh.pop %v1067
    %1070 = vrot.lane.b32.xlu0 %v1068, 32
    %v1071 = vpop.permute.xlu0 %1070
    %v1073 = vmul.f32 %v1053, %v1071
    %1075 = vrot.lane.b32.xlu0 %v1073, 64
    %v1076 = vpop.permute.xlu0 %1075
    %v1079 = vrot.slane %v1038, 6
    %1080 = vrot.lane.b32.xlu0 %v1079, 96
    %v1081 = vpop.permute.xlu0 %1080
    %v1083 = vsel %vm198, %v1076, %v1081
    %v1085 = vrot.slane %v1083, 2
    %v1086 = vsel %vm202, %v1085, 0
    %1088 = vmatprep.subr.mxu0 0.0
    %1089 = vmatpush1.msra.mxu0 0.0
    %1090 = vmatprep.subr.mxu0 0.0
    %1091 = vmatpush1.msra.mxu0 0.0
    %1092 = vmatprep.subr.mxu0 0.0
    %1093 = vmatpush1.msra.mxu0 0.0
    %1094 = vmatprep.subr.mxu0 0.0
    %1095 = vmatpush1.msra.mxu0 0.0
    %1096 = vmatprep.subr.mxu0 0.0
    %1097 = vmatpush1.msra.mxu0 0.0
    %1098 = vmatprep.subr.mxu0 0.0
    %1099 = vmatpush1.msra.mxu0 0.0
    %1100 = vmatprep.subr.mxu0 0.0
    %1101 = vmatpush1.msra.mxu0 0.0
    %1102 = vmatprep.subr.mxu0 0.0
    %1103 = vmatpush1.msra.mxu0 0.0
    %1104 = vmatprep.subr.mxu0 %v53
    %1105 = vmatpush1.msra.mxu0 %v52
    %1106 = vmatprep.subr.mxu0 %v51
    %1107 = vmatpush1.msra.mxu0 %v50
    %1108 = vmatprep.subr.mxu0 %v49
    %1109 = vmatpush1.msra.mxu0 %v48
    %1110 = vmatprep.subr.mxu0 %v47
    %1111 = vmatpush1.msra.mxu0 %v46
    %1112 = vmatprep.subr.mxu0 %v45
    %1113 = vmatpush1.msra.mxu0 %v44
    %1114 = vmatprep.subr.mxu0 %v43
    %1115 = vmatpush1.msra.mxu0 %v42
    %1116 = vmatprep.subr.mxu0 %v41
    %1117 = vmatpush1.msra.mxu0 %v40
    %1118 = vmatprep.subr.mxu0 %v39
    %1119 = vmatpush1.msra.mxu0 %v38
    %1120 = vmatprep.subr.mxu0 0.0
    %1121 = vmatpush2.msra.mxu0 0.0
    %1122 = vmatprep.subr.mxu0 0.0
    %1123 = vmatpush2.msra.mxu0 0.0
    %1124 = vmatprep.subr.mxu0 0.0
    %1125 = vmatpush2.msra.mxu0 0.0
    %1126 = vmatprep.subr.mxu0 0.0
    %1127 = vmatpush2.msra.mxu0 0.0
    %1128 = vmatprep.subr.mxu0 0.0
    %1129 = vmatpush2.msra.mxu0 0.0
    %1130 = vmatprep.subr.mxu0 0.0
    %1131 = vmatpush2.msra.mxu0 0.0
    %1132 = vmatprep.subr.mxu0 0.0
    %1133 = vmatpush2.msra.mxu0 0.0
    %1134 = vmatprep.subr.mxu0 0.0
    %1135 = vmatpush2.msra.mxu0 0.0
    %1136 = vmatprep.subr.mxu0 0.0
    %1137 = vmatpush2.msra.mxu0 0.0
    %1138 = vmatprep.subr.mxu0 0.0
    %1139 = vmatpush2.msra.mxu0 0.0
    %1140 = vmatprep.subr.mxu0 0.0
    %1141 = vmatpush2.msra.mxu0 0.0
    %1142 = vmatprep.subr.mxu0 0.0
    %1143 = vmatpush2.msra.mxu0 0.0
    %1144 = vmatprep.subr.mxu0 0.0
    %1145 = vmatpush2.msra.mxu0 0.0
    %1146 = vmatprep.subr.mxu0 0.0
    %1147 = vmatpush2.msra.mxu0 0.0
    %1148 = vmatprep.subr.mxu0 0.0
    %1149 = vmatpush2.msra.mxu0 0.0
    %1150 = vmatprep.subr.mxu0 0.0
    %1151 = vmatpush2.msra.mxu0 0.0
    %1152 = vmatprep.mubr.f32.mxu0 0.0
    %1153 = vmatmul.mubr.f32.gmra.mxu0 %v1086
    %v1154 = vpop.f32.mrf.mxu0
    %v1155 = vadd.f32 %v59, %v1154
    %v1156 = vpop.f32.mrf.mxu0
    %v1157 = vadd.f32 %v63, %v1156
    %1158 = vdwg.mxu0
    %v1159 = vmul.f32 %v1155, 2.0
    %v1160 = vsel %vm164, %v1155, %v1159
    %v1161 = vxor.u32 %v1160, 2147483648
    %v1162 = vmul.f32 %v1161, 1.442695
    %v1163 = vpow.pop %v1162
    %v1164 = vadd.f32 %v1163, 1.0
    %v1165 = vrcp.pop %v1164
    %v1166 = vmul.f32 1.0, %v1165
    %v1167 = vmul.f32 %v1166, 2.0
    %v1168 = vsub.f32 %v1167, 1.0
    %v1169 = vsel %vm164, %v1166, %v1168
    %v1170 = vmul.f32 %v1169, %v1032
    %1172 = vrot.lane.b32.xlu0 %v1169, 32
    %v1173 = vpop.permute.xlu0 %1172
    %v1175 = vmul.f32 %v1169, %v1173
    %1177 = vrot.lane.b32.xlu0 %v1175, 32
    %v1178 = vpop.permute.xlu0 %1177
    %v1180 = vadd.f32 %v1170, %v1178
    %v1181 = vtanh.pop %v1180
    %1183 = vrot.lane.b32.xlu0 %v1181, 32
    %v1184 = vpop.permute.xlu0 %1183
    %v1186 = vmul.f32 %v1169, %v1184
    %v1187 = vadd.f32 %v154, %v1157
    %v1188 = vmul.f32 %v1187, 2.0
    %v1189 = vsel %vm164, %v1187, %v1188
    %v1190 = vxor.u32 %v1189, 2147483648
    %v1191 = vmul.f32 %v1190, 1.442695
    %v1192 = vpow.pop %v1191
    %v1193 = vadd.f32 %v1192, 1.0
    %v1194 = vrcp.pop %v1193
    %v1195 = vmul.f32 1.0, %v1194
    %v1196 = vmul.f32 %v1195, 2.0
    %v1197 = vsub.f32 %v1196, 1.0
    %v1198 = vsel %vm164, %v1195, %v1197
    %v1200 = vrot.slane %v1067, 2
    %v1202 = vmul.f32 %v1198, %v1200
    %1204 = vrot.lane.b32.xlu0 %v1198, 32
    %v1205 = vpop.permute.xlu0 %1204
    %v1207 = vmul.f32 %v1198, %v1205
    %1209 = vrot.lane.b32.xlu0 %v1207, 32
    %v1210 = vpop.permute.xlu0 %1209
    %v1212 = vadd.f32 %v1202, %v1210
    %v1213 = vtanh.pop %v1212
    %1215 = vrot.lane.b32.xlu0 %v1213, 32
    %v1216 = vpop.permute.xlu0 %1215
    %v1218 = vmul.f32 %v1198, %v1216
    %1220 = vrot.lane.b32.xlu0 %v1218, 64
    %v1221 = vpop.permute.xlu0 %1220
    %1224 = vrot.lane.b32.xlu0 %v1186, 96
    %v1225 = vpop.permute.xlu0 %1224
    %v1227 = vsel %vm198, %v1221, %v1225
    %v1229 = vsel %vm202, %v1227, 0
    %1231 = vmatprep.subr.mxu0 0.0
    %1232 = vmatpush1.msra.mxu0 0.0
    %1233 = vmatprep.subr.mxu0 0.0
    %1234 = vmatpush1.msra.mxu0 0.0
    %1235 = vmatprep.subr.mxu0 0.0
    %1236 = vmatpush1.msra.mxu0 0.0
    %1237 = vmatprep.subr.mxu0 0.0
    %1238 = vmatpush1.msra.mxu0 0.0
    %1239 = vmatprep.subr.mxu0 0.0
    %1240 = vmatpush1.msra.mxu0 0.0
    %1241 = vmatprep.subr.mxu0 0.0
    %1242 = vmatpush1.msra.mxu0 0.0
    %1243 = vmatprep.subr.mxu0 0.0
    %1244 = vmatpush1.msra.mxu0 0.0
    %1245 = vmatprep.subr.mxu0 0.0
    %1246 = vmatpush1.msra.mxu0 0.0
    %1247 = vmatprep.subr.mxu0 %v53
    %1248 = vmatpush1.msra.mxu0 %v52
    %1249 = vmatprep.subr.mxu0 %v51
    %1250 = vmatpush1.msra.mxu0 %v50
    %1251 = vmatprep.subr.mxu0 %v49
    %1252 = vmatpush1.msra.mxu0 %v48
    %1253 = vmatprep.subr.mxu0 %v47
    %1254 = vmatpush1.msra.mxu0 %v46
    %1255 = vmatprep.subr.mxu0 %v45
    %1256 = vmatpush1.msra.mxu0 %v44
    %1257 = vmatprep.subr.mxu0 %v43
    %1258 = vmatpush1.msra.mxu0 %v42
    %1259 = vmatprep.subr.mxu0 %v41
    %1260 = vmatpush1.msra.mxu0 %v40
    %1261 = vmatprep.subr.mxu0 %v39
    %1262 = vmatpush1.msra.mxu0 %v38
    %1263 = vmatprep.subr.mxu0 0.0
    %1264 = vmatpush2.msra.mxu0 0.0
    %1265 = vmatprep.subr.mxu0 0.0
    %1266 = vmatpush2.msra.mxu0 0.0
    %1267 = vmatprep.subr.mxu0 0.0
    %1268 = vmatpush2.msra.mxu0 0.0
    %1269 = vmatprep.subr.mxu0 0.0
    %1270 = vmatpush2.msra.mxu0 0.0
    %1271 = vmatprep.subr.mxu0 0.0
    %1272 = vmatpush2.msra.mxu0 0.0
    %1273 = vmatprep.subr.mxu0 0.0
    %1274 = vmatpush2.msra.mxu0 0.0
    %1275 = vmatprep.subr.mxu0 0.0
    %1276 = vmatpush2.msra.mxu0 0.0
    %1277 = vmatprep.subr.mxu0 0.0
    %1278 = vmatpush2.msra.mxu0 0.0
    %1279 = vmatprep.subr.mxu0 0.0
    %1280 = vmatpush2.msra.mxu0 0.0
    %1281 = vmatprep.subr.mxu0 0.0
    %1282 = vmatpush2.msra.mxu0 0.0
    %1283 = vmatprep.subr.mxu0 0.0
    %1284 = vmatpush2.msra.mxu0 0.0
    %1285 = vmatprep.subr.mxu0 0.0
    %1286 = vmatpush2.msra.mxu0 0.0
    %1287 = vmatprep.subr.mxu0 0.0
    %1288 = vmatpush2.msra.mxu0 0.0
    %1289 = vmatprep.subr.mxu0 0.0
    %1290 = vmatpush2.msra.mxu0 0.0
    %1291 = vmatprep.subr.mxu0 0.0
    %1292 = vmatpush2.msra.mxu0 0.0
    %1293 = vmatprep.subr.mxu0 0.0
    %1294 = vmatpush2.msra.mxu0 0.0
    %1295 = vmatprep.mubr.f32.mxu0 0.0
    %1296 = vmatmul.mubr.f32.gmra.mxu0 %v1229
    %v1297 = vpop.f32.mrf.mxu0
    %v1298 = vadd.f32 %v59, %v1297
    %v1299 = vpop.f32.mrf.mxu0
    %1300 = vdwg.mxu0
    %v1301 = vmul.f32 %v1298, 2.0
    %v1302 = vsel %vm164, %v1298, %v1301
    %v1303 = vxor.u32 %v1302, 2147483648
    %v1304 = vmul.f32 %v1303, 1.442695
    %v1305 = vpow.pop %v1304
    %v1306 = vadd.f32 %v1305, 1.0
    %v1307 = vrcp.pop %v1306
    %v1308 = vmul.f32 1.0, %v1307
    %v1309 = vmul.f32 %v1308, 2.0
    %v1310 = vsub.f32 %v1309, 1.0
    %v1311 = vsel %vm164, %v1308, %v1310
    %v1312 = vmul.f32 %v1311, %v1180
    %1314 = vrot.lane.b32.xlu0 %v1311, 32
    %v1315 = vpop.permute.xlu0 %1314
    %v1317 = vmul.f32 %v1311, %v1315
    %1319 = vrot.lane.b32.xlu0 %v1317, 32
    %v1320 = vpop.permute.xlu0 %1319
    %v1322 = vadd.f32 %v1312, %v1320
    %v1323 = vtanh.pop %v1322
    %1325 = vrot.lane.b32.xlu0 %v1323, 32
    %v1326 = vpop.permute.xlu0 %1325
    %v1328 = vmul.f32 %v1311, %v1326
    %v1329 = vld [vmem:[%s5] sm:$0xff]
    %v1330 = vld [vmem:[%s5 + $0x8] sm:$0xff]
    %v1331 = vld [vmem:[%s5 + $0x10] sm:$0xff]
    %v1332 = vld [vmem:[%s5 + $0x18] sm:$0xff]
    %v1333 = vld [vmem:[%s6] sm:$0x1]
    %v1335 = vlaneseq
    %v1336 = vshrl.u32 %v1335, 7
    %v1337 = vsub.s32 0, %v1336
    %v1338 = vrot.slane %v1333, %v1337
    %1341 = vrot.lane.b32.xlu0 %v1328, 64
    %v1342 = vpop.permute.xlu0 %1341
    %v1343 = vsel %vm198, %v1342, 0
    %1345 = vmatprep.subr.mxu0 0.0
    %1346 = vmatpush1.msra.mxu0 0.0
    %1347 = vmatprep.subr.mxu0 0.0
    %1348 = vmatpush1.msra.mxu0 0.0
    %1349 = vmatprep.subr.mxu0 0.0
    %1350 = vmatpush1.msra.mxu0 0.0
    %1351 = vmatprep.subr.mxu0 0.0
    %1352 = vmatpush1.msra.mxu0 0.0
    %1353 = vmatprep.subr.mxu0 0.0
    %1354 = vmatpush1.msra.mxu0 0.0
    %1355 = vmatprep.subr.mxu0 0.0
    %1356 = vmatpush1.msra.mxu0 0.0
    %1357 = vmatprep.subr.mxu0 0.0
    %1358 = vmatpush1.msra.mxu0 0.0
    %1359 = vmatprep.subr.mxu0 0.0
    %1360 = vmatpush1.msra.mxu0 0.0
    %1361 = vmatprep.subr.mxu0 0.0
    %1362 = vmatpush1.msra.mxu0 0.0
    %1363 = vmatprep.subr.mxu0 0.0
    %1364 = vmatpush1.msra.mxu0 0.0
    %1365 = vmatprep.subr.mxu0 0.0
    %1366 = vmatpush1.msra.mxu0 0.0
    %1367 = vmatprep.subr.mxu0 0.0
    %1368 = vmatpush1.msra.mxu0 0.0
    %1369 = vmatprep.subr.mxu0 0.0
    %1370 = vmatpush1.msra.mxu0 %v1332
    %1371 = vmatprep.subr.mxu0 0.0
    %1372 = vmatpush1.msra.mxu0 %v1331
    %1373 = vmatprep.subr.mxu0 0.0
    %1374 = vmatpush1.msra.mxu0 %v1330
    %1375 = vmatprep.subr.mxu0 0.0
    %1376 = vmatpush1.msra.mxu0 %v1329
    %1377 = vmatprep.subr.mxu0 0.0
    %1378 = vmatpush2.msra.mxu0 0.0
    %1379 = vmatprep.subr.mxu0 0.0
    %1380 = vmatpush2.msra.mxu0 0.0
    %1381 = vmatprep.subr.mxu0 0.0
    %1382 = vmatpush2.msra.mxu0 0.0
    %1383 = vmatprep.subr.mxu0 0.0
    %1384 = vmatpush2.msra.mxu0 0.0
    %1385 = vmatprep.subr.mxu0 0.0
    %1386 = vmatpush2.msra.mxu0 0.0
    %1387 = vmatprep.subr.mxu0 0.0
    %1388 = vmatpush2.msra.mxu0 0.0
    %1389 = vmatprep.subr.mxu0 0.0
    %1390 = vmatpush2.msra.mxu0 0.0
    %1391 = vmatprep.subr.mxu0 0.0
    %1392 = vmatpush2.msra.mxu0 0.0
    %1393 = vmatprep.subr.mxu0 0.0
    %1394 = vmatpush2.msra.mxu0 0.0
    %1395 = vmatprep.subr.mxu0 0.0
    %1396 = vmatpush2.msra.mxu0 0.0
    %1397 = vmatprep.subr.mxu0 0.0
    %1398 = vmatpush2.msra.mxu0 0.0
    %1399 = vmatprep.subr.mxu0 0.0
    %1400 = vmatpush2.msra.mxu0 0.0
    %1401 = vmatprep.subr.mxu0 0.0
    %1402 = vmatpush2.msra.mxu0 0.0
    %1403 = vmatprep.subr.mxu0 0.0
    %1404 = vmatpush2.msra.mxu0 0.0
    %1405 = vmatprep.subr.mxu0 0.0
    %1406 = vmatpush2.msra.mxu0 0.0
    %1407 = vmatprep.subr.mxu0 0.0
    %1408 = vmatpush2.msra.mxu0 0.0
    %1409 = vmatprep.mubr.f32.mxu0 0.0
    %1410 = vmatmul.mubr.f32.gmra.mxu0 %v1343
    %v1411 = vpop.f32.mrf.mxu0
    %v1412 = vadd.f32 %v1338, %v1411
    %v1413 = vpop.f32.mrf.mxu0
    %1414 = vdwg.mxu0
    %vm1415 = vcmp.lt.s32.totalorder %v163, 3
    %v1416 = vmax.f32 %v1412, 0.0
    %vm1417 = vcmp.ne.f32.partialorder %v1412, %v1412
    %v1418 = vadd.f32 %v1412, 0.0
    %v1419 = vand.u32 2147483647, %v1412
    %v1420 = vsub.f32 0.0, %v1419
    %v1421 = vmul.f32 %v1420, 1.442695
    %v1422 = vpow.pop %v1421
    %v1423 = vadd.f32 %v1422, 1.0
    %v1424 = vlog2.pop %v1423
    %v1425 = vmul.f32 %v1424, 0.6931472
    %v1426 = vmul.f32 -0.5, %v1422
    %v1427 = vadd.f32 %v1426, 1.0
    %v1428 = vmul.f32 %v1427, %v1422
    %v1429 = vand.u32 2147483647, %v1422
    %vm1430 = vcmp.lt.f32.partialorder %v1429, 0.0004427343
    %v1431 = vsel %vm1430, %v1428, %v1425
    %v1432 = vadd.f32 %v1416, %v1431
    %v1433 = vsel %vm1417, %v1418, %v1432
    %v1434 = vadd.f32 %v1433, 0.0001
    %v1435 = vsel %vm1415, %v1412, %v1434
    %vm1436 = vcmask 41984
    %1437 = vst.msk [vmem:[%s7] sm:$0x3] %vm1436, %v1435
    // Predicated region
    $region34: #{lstm_recognition_forward.1} parent=1 // pred_check
      _
    $region35: #{lstm_recognition_forward.1} parent=1 // pred_check_branch
      %1439 = sbr.rel (0) target = $region37
    $region36: #{lstm_recognition_forward.1} parent=1 // pred_region
      _
    $region37: #{lstm_recognition_forward.1} parent=1 // pred_fallthru
      _
    // Predicated region
    $region38: #{lstm_recognition_forward.1} parent=1 // pred_check
      _
    $region39: #{lstm_recognition_forward.1} parent=1 // pred_check_branch
      %1441 = sbr.rel (0) target = $region41
    $region40: #{lstm_recognition_forward.1} parent=1 // pred_region
      _
    $region41: #{lstm_recognition_forward.1} parent=1 // pred_fallthru
      _
    %1442 = vsyncpa [#allocation3], 1

</llo_original>
